<compile_context>
chip_gen: v5e
topology: v5e:2x2
jax: 0.10.0
libtpu: 0.0.40
codegen_flags: <defaults>
</compile_context>

<pallas_src>
import jax
import jax.numpy as jnp
from jax.experimental import pallas as pl
from jax.experimental.pallas import tpu as pltpu

# ---- problem sizes (small, consistent with the module's forward) ------------
N, T = 2, 8          # batch, sequence length
H = 768              # BERT hidden size
V = 128              # vocab_size for the fc head (lane-dense multiple of 128)
VOCAB_IN = 256       # input token-id range (stand-in embedding table size)
M = N * T            # flattened rows


def _net_kernel(ids_ref,                      # (M,) int32, SMEM (scalar prefetch)
                emb_hbm,                      # (VOCAB_IN, H) f32, HBM (pl.ANY)
                mask_ref, w_ref, b_ref,       # VMEM inputs
                enc_ref, logits_ref, yhat_ref,  # VMEM outputs
                gather, sems):                # VMEM scratch, DMA semaphores
    # --- DMA-gather the M needed "encoder" rows from HBM (ids from SMEM) -----
    def row_copy(i):
        return pltpu.make_async_copy(
            emb_hbm.at[pl.ds(ids_ref[i], 1), :],   # dynamic source row
            gather.at[pl.ds(i, 1), :],             # static destination row
            sems.at[i])

    for i in range(M):          # M=16, statically unrolled DMA issue
        row_copy(i).start()
    for i in range(M):
        row_copy(i).wait()

    # --- masking layer (masking_layer = ones(768) in the module) -------------
    encm = gather[...] * mask_ref[...]             # (M, H) f32
    enc_ref[...] = encm

    # --- fc head: bf16 operands, f32 MXU accumulation, f32 bias --------------
    logits = jnp.dot(encm.astype(jnp.bfloat16), w_ref[...],
                     preferred_element_type=jnp.float32) + b_ref[...]
    logits_ref[...] = logits                       # (M, V) f32, lane-dense

    # --- argmax over vocab (lane) axis; first index on ties (torch.argmax) ---
    mx = jnp.max(logits, axis=-1, keepdims=True)
    lane = jax.lax.broadcasted_iota(jnp.int32, logits.shape, 1)
    yhat = jnp.min(jnp.where(logits == mx, lane, jnp.int32(V)),
                   axis=-1, keepdims=True)         # (M, 1) int32
    yhat_ref[...] = jnp.broadcast_to(yhat, (M, 128))   # lane-dense int32 store


def net_forward(x, y, params):
    """Mirrors Net.forward: returns (enc, logits, y, y_hat)."""
    # TODO(synk): the pretrained QCRI BERT encoder has no in-script Pallas
    # equivalent; a deterministic embedding table (HBM-resident, row-gathered
    # in-kernel) stands in for bert(x)[-1].
    ids = x.reshape(M).astype(jnp.int32)           # scalar-prefetched token ids

    grid_spec = pltpu.PrefetchScalarGridSpec(
        num_scalar_prefetch=1,
        grid=(1,),
        in_specs=[
            pl.BlockSpec(memory_space=pl.ANY),               # emb stays in HBM
            pl.BlockSpec((1, H), lambda i, ids: (0, 0)),     # mask
            pl.BlockSpec((H, V), lambda i, ids: (0, 0)),     # fc weight (bf16)
            pl.BlockSpec((1, V), lambda i, ids: (0, 0)),     # fc bias
        ],
        out_specs=(
            pl.BlockSpec((M, H), lambda i, ids: (0, 0)),     # masked encoding
            pl.BlockSpec((M, V), lambda i, ids: (0, 0)),     # logits
            pl.BlockSpec((M, 128), lambda i, ids: (0, 0)),   # y_hat (lane-dense)
        ),
        scratch_shapes=[
            pltpu.VMEM((M, H), jnp.float32),                 # gathered rows
            pltpu.SemaphoreType.DMA((M,)),                   # one sem per row DMA
        ],
    )

    cost = pl.CostEstimate(
        flops=2 * M * H * V,
        transcendentals=0,
        bytes_accessed=(M * H * 4          # gathered emb rows
                        + H * V * 2        # fc weight
                        + H * 4 + V * 4    # mask + bias
                        + M * H * 4        # enc out
                        + M * V * 4        # logits out
                        + M * 128 * 4),    # y_hat out
    )

    encm_flat, logits_flat, yhat_full = pl.pallas_call(
        _net_kernel,
        out_shape=(
            jax.ShapeDtypeStruct((M, H), jnp.float32),
            jax.ShapeDtypeStruct((M, V), jnp.float32),
            jax.ShapeDtypeStruct((M, 128), jnp.int32),
        ),
        grid_spec=grid_spec,
        compiler_params=pltpu.CompilerParams(
            dimension_semantics=("arbitrary",)),
        cost_estimate=cost,
    )(ids, params["emb"], params["mask"], params["fc_w"], params["fc_b"])

    enc_out = encm_flat.reshape(N, T, H)           # enc after masking layer
    logits = logits_flat.reshape(N, T, V)
    y_hat = yhat_full[:, 0].reshape(N, T)
    return enc_out, logits, y, y_hat


def init_params(key):
    k_emb, k_w, k_b = jax.random.split(key, 3)
    return {
        # f32 table in HBM: word-aligned single-row DMA gather, doubles as enc.
        "emb": jax.random.normal(k_emb, (VOCAB_IN, H), jnp.float32) * 0.02,
        "mask": jnp.ones((1, H), jnp.float32),     # masking_layer = ones(768)
        # bf16 fc weight (halves weight DMA), f32 bias.
        "fc_w": (jax.random.normal(k_w, (H, V), jnp.float32)
                 * 0.02).astype(jnp.bfloat16),
        "fc_b": jax.random.normal(k_b, (1, V), jnp.float32) * 0.02,
    }


if __name__ == "__main__":
    key = jax.random.PRNGKey(0)
    k_x, k_y, k_p = jax.random.split(key, 3)
    x = jax.random.randint(k_x, (N, T), 0, VOCAB_IN, dtype=jnp.int32)
    y = jax.random.randint(k_y, (N, T), 0, V, dtype=jnp.int32)
    params = init_params(k_p)

    enc, logits, y_out, y_hat = jax.block_until_ready(net_forward(x, y, params))

    # shape / dtype checks
    assert enc.shape == (N, T, H) and enc.dtype == jnp.float32
    assert logits.shape == (N, T, V) and logits.dtype == jnp.float32
    assert y_out.shape == (N, T)
    assert y_hat.shape == (N, T) and y_hat.dtype == jnp.int32

    # reference (plain JAX, same f32-gather / bf16-weight / f32-accumulate recipe)
    enc_gather = params["emb"][x]                                # (N, T, H) f32
    encm_ref = enc_gather * params["mask"]
    logits_ref = (jnp.dot(encm_ref.reshape(M, H).astype(jnp.bfloat16),
                          params["fc_w"],
                          preferred_element_type=jnp.float32)
                  + params["fc_b"]).reshape(N, T, V)

    assert bool(jnp.allclose(enc, encm_ref, rtol=1e-6, atol=1e-6))
    assert bool(jnp.allclose(logits, logits_ref, rtol=2e-2, atol=2e-2))
    # argmax consistency against the kernel's own f32 logits (tie-break = first)
    ref_yhat = jnp.argmax(logits, axis=-1).astype(jnp.int32)
    assert bool(jnp.all(ref_yhat == y_hat))
    print("KERNEL_OK")
</pallas_src>

<mosaic_0001>
module attributes {stable_mosaic.version = 11 : i64} {
  func.func @_net_kernel(%arg0: i32, %arg1: memref<16xi32, #tpu.memory_space<smem>>, %arg2: memref<256x768xf32, #tpu.memory_space<any>>, %arg3: memref<1x768xf32, #tpu.memory_space<vmem>>, %arg4: memref<768x128xbf16, #tpu.memory_space<vmem>>, %arg5: memref<1x128xf32, #tpu.memory_space<vmem>>, %arg6: memref<16x768xf32, #tpu.memory_space<vmem>>, %arg7: memref<16x128xf32, #tpu.memory_space<vmem>>, %arg8: memref<16x128xi32, #tpu.memory_space<vmem>>, %arg9: memref<16x768xf32, #tpu.memory_space<vmem>>, %arg10: memref<16x!tpu.dma_semaphore, #tpu.memory_space<semaphore_mem>>) attributes {dimension_semantics = [#tpu.dimension_semantics<arbitrary>], iteration_bounds = array<i64: 1>, scalar_prefetch = 1 : i64, scratch_operands = 2 : i64, tpu.core_type = #tpu.core_type<tc>, window_params = [{}, {pipeline_mode = #tpu.pipeline_mode<synchronous>, transform_indices = @transform_1, window_bounds = array<i64: 1, 768>}, {pipeline_mode = #tpu.pipeline_mode<synchronous>, transform_indices = @transform_2, window_bounds = array<i64: 768, 128>}, {pipeline_mode = #tpu.pipeline_mode<synchronous>, transform_indices = @transform_3, window_bounds = array<i64: 1, 128>}, {pipeline_mode = #tpu.pipeline_mode<synchronous>, transform_indices = @transform_4, window_bounds = array<i64: 16, 768>}, {pipeline_mode = #tpu.pipeline_mode<synchronous>, transform_indices = @transform_5, window_bounds = array<i64: 16, 128>}, {pipeline_mode = #tpu.pipeline_mode<synchronous>, transform_indices = @transform_6, window_bounds = array<i64: 16, 128>}]} {
    %c0 = arith.constant 0 : index
    %0 = memref.load %arg1[%c0] : memref<16xi32, #tpu.memory_space<smem>>
    %c0_i32 = arith.constant 0 : i32
    %c0_i32_0 = arith.constant 0 : i32
    %1 = tpu.memref_slice %arg2[%0, %c0_i32_0] : memref<256x768xf32, #tpu.memory_space<any>> -> memref<1x768xf32, #tpu.memory_space<any>>
    %c0_i32_1 = arith.constant 0 : i32
    %c0_i32_2 = arith.constant 0 : i32
    %2 = tpu.memref_slice %arg9[%c0_i32_1, %c0_i32_2] : memref<16x768xf32, #tpu.memory_space<vmem>> -> memref<1x768xf32, #tpu.memory_space<vmem>>
    %3 = tpu.memref_slice %arg10[%c0_i32] : memref<16x!tpu.dma_semaphore, #tpu.memory_space<semaphore_mem>> -> memref<1x!tpu.dma_semaphore, #tpu.memory_space<semaphore_mem>>
    %4 = tpu.memref_squeeze %3 : memref<1x!tpu.dma_semaphore, #tpu.memory_space<semaphore_mem>> -> memref<!tpu.dma_semaphore, #tpu.memory_space<semaphore_mem>>
    tpu.enqueue_dma source(%1 : memref<1x768xf32, #tpu.memory_space<any>>) target(%2 : memref<1x768xf32, #tpu.memory_space<vmem>>) target_semaphore(%4 : memref<!tpu.dma_semaphore, #tpu.memory_space<semaphore_mem>>)
    %c1 = arith.constant 1 : index
    %5 = memref.load %arg1[%c1] : memref<16xi32, #tpu.memory_space<smem>>
    %c1_i32 = arith.constant 1 : i32
    %c0_i32_3 = arith.constant 0 : i32
    %6 = tpu.memref_slice %arg2[%5, %c0_i32_3] : memref<256x768xf32, #tpu.memory_space<any>> -> memref<1x768xf32, #tpu.memory_space<any>>
    %c1_i32_4 = arith.constant 1 : i32
    %c0_i32_5 = arith.constant 0 : i32
    %7 = tpu.memref_slice %arg9[%c1_i32_4, %c0_i32_5] : memref<16x768xf32, #tpu.memory_space<vmem>> -> memref<1x768xf32, #tpu.memory_space<vmem>>
    %8 = tpu.memref_slice %arg10[%c1_i32] : memref<16x!tpu.dma_semaphore, #tpu.memory_space<semaphore_mem>> -> memref<1x!tpu.dma_semaphore, #tpu.memory_space<semaphore_mem>>
    %9 = tpu.memref_squeeze %8 : memref<1x!tpu.dma_semaphore, #tpu.memory_space<semaphore_mem>> -> memref<!tpu.dma_semaphore, #tpu.memory_space<semaphore_mem>>
    tpu.enqueue_dma source(%6 : memref<1x768xf32, #tpu.memory_space<any>>) target(%7 : memref<1x768xf32, #tpu.memory_space<vmem>>) target_semaphore(%9 : memref<!tpu.dma_semaphore, #tpu.memory_space<semaphore_mem>>)
    %c2 = arith.constant 2 : index
    %10 = memref.load %arg1[%c2] : memref<16xi32, #tpu.memory_space<smem>>
    %c2_i32 = arith.constant 2 : i32
    %c0_i32_6 = arith.constant 0 : i32
    %11 = tpu.memref_slice %arg2[%10, %c0_i32_6] : memref<256x768xf32, #tpu.memory_space<any>> -> memref<1x768xf32, #tpu.memory_space<any>>
    %c2_i32_7 = arith.constant 2 : i32
    %c0_i32_8 = arith.constant 0 : i32
    %12 = tpu.memref_slice %arg9[%c2_i32_7, %c0_i32_8] : memref<16x768xf32, #tpu.memory_space<vmem>> -> memref<1x768xf32, #tpu.memory_space<vmem>>
    %13 = tpu.memref_slice %arg10[%c2_i32] : memref<16x!tpu.dma_semaphore, #tpu.memory_space<semaphore_mem>> -> memref<1x!tpu.dma_semaphore, #tpu.memory_space<semaphore_mem>>
    %14 = tpu.memref_squeeze %13 : memref<1x!tpu.dma_semaphore, #tpu.memory_space<semaphore_mem>> -> memref<!tpu.dma_semaphore, #tpu.memory_space<semaphore_mem>>
    tpu.enqueue_dma source(%11 : memref<1x768xf32, #tpu.memory_space<any>>) target(%12 : memref<1x768xf32, #tpu.memory_space<vmem>>) target_semaphore(%14 : memref<!tpu.dma_semaphore, #tpu.memory_space<semaphore_mem>>)
    %c3 = arith.constant 3 : index
    %15 = memref.load %arg1[%c3] : memref<16xi32, #tpu.memory_space<smem>>
    %c3_i32 = arith.constant 3 : i32
    %c0_i32_9 = arith.constant 0 : i32
    %16 = tpu.memref_slice %arg2[%15, %c0_i32_9] : memref<256x768xf32, #tpu.memory_space<any>> -> memref<1x768xf32, #tpu.memory_space<any>>
    %c3_i32_10 = arith.constant 3 : i32
    %c0_i32_11 = arith.constant 0 : i32
    %17 = tpu.memref_slice %arg9[%c3_i32_10, %c0_i32_11] : memref<16x768xf32, #tpu.memory_space<vmem>> -> memref<1x768xf32, #tpu.memory_space<vmem>>
    %18 = tpu.memref_slice %arg10[%c3_i32] : memref<16x!tpu.dma_semaphore, #tpu.memory_space<semaphore_mem>> -> memref<1x!tpu.dma_semaphore, #tpu.memory_space<semaphore_mem>>
    %19 = tpu.memref_squeeze %18 : memref<1x!tpu.dma_semaphore, #tpu.memory_space<semaphore_mem>> -> memref<!tpu.dma_semaphore, #tpu.memory_space<semaphore_mem>>
    tpu.enqueue_dma source(%16 : memref<1x768xf32, #tpu.memory_space<any>>) target(%17 : memref<1x768xf32, #tpu.memory_space<vmem>>) target_semaphore(%19 : memref<!tpu.dma_semaphore, #tpu.memory_space<semaphore_mem>>)
    %c4 = arith.constant 4 : index
    %20 = memref.load %arg1[%c4] : memref<16xi32, #tpu.memory_space<smem>>
    %c4_i32 = arith.constant 4 : i32
    %c0_i32_12 = arith.constant 0 : i32
    %21 = tpu.memref_slice %arg2[%20, %c0_i32_12] : memref<256x768xf32, #tpu.memory_space<any>> -> memref<1x768xf32, #tpu.memory_space<any>>
    %c4_i32_13 = arith.constant 4 : i32
    %c0_i32_14 = arith.constant 0 : i32
    %22 = tpu.memref_slice %arg9[%c4_i32_13, %c0_i32_14] : memref<16x768xf32, #tpu.memory_space<vmem>> -> memref<1x768xf32, #tpu.memory_space<vmem>>
    %23 = tpu.memref_slice %arg10[%c4_i32] : memref<16x!tpu.dma_semaphore, #tpu.memory_space<semaphore_mem>> -> memref<1x!tpu.dma_semaphore, #tpu.memory_space<semaphore_mem>>
    %24 = tpu.memref_squeeze %23 : memref<1x!tpu.dma_semaphore, #tpu.memory_space<semaphore_mem>> -> memref<!tpu.dma_semaphore, #tpu.memory_space<semaphore_mem>>
    tpu.enqueue_dma source(%21 : memref<1x768xf32, #tpu.memory_space<any>>) target(%22 : memref<1x768xf32, #tpu.memory_space<vmem>>) target_semaphore(%24 : memref<!tpu.dma_semaphore, #tpu.memory_space<semaphore_mem>>)
    %c5 = arith.constant 5 : index
    %25 = memref.load %arg1[%c5] : memref<16xi32, #tpu.memory_space<smem>>
    %c5_i32 = arith.constant 5 : i32
    %c0_i32_15 = arith.constant 0 : i32
    %26 = tpu.memref_slice %arg2[%25, %c0_i32_15] : memref<256x768xf32, #tpu.memory_space<any>> -> memref<1x768xf32, #tpu.memory_space<any>>
    %c5_i32_16 = arith.constant 5 : i32
    %c0_i32_17 = arith.constant 0 : i32
    %27 = tpu.memref_slice %arg9[%c5_i32_16, %c0_i32_17] : memref<16x768xf32, #tpu.memory_space<vmem>> -> memref<1x768xf32, #tpu.memory_space<vmem>>
    %28 = tpu.memref_slice %arg10[%c5_i32] : memref<16x!tpu.dma_semaphore, #tpu.memory_space<semaphore_mem>> -> memref<1x!tpu.dma_semaphore, #tpu.memory_space<semaphore_mem>>
    %29 = tpu.memref_squeeze %28 : memref<1x!tpu.dma_semaphore, #tpu.memory_space<semaphore_mem>> -> memref<!tpu.dma_semaphore, #tpu.memory_space<semaphore_mem>>
    tpu.enqueue_dma source(%26 : memref<1x768xf32, #tpu.memory_space<any>>) target(%27 : memref<1x768xf32, #tpu.memory_space<vmem>>) target_semaphore(%29 : memref<!tpu.dma_semaphore, #tpu.memory_space<semaphore_mem>>)
    %c6 = arith.constant 6 : index
    %30 = memref.load %arg1[%c6] : memref<16xi32, #tpu.memory_space<smem>>
    %c6_i32 = arith.constant 6 : i32
    %c0_i32_18 = arith.constant 0 : i32
    %31 = tpu.memref_slice %arg2[%30, %c0_i32_18] : memref<256x768xf32, #tpu.memory_space<any>> -> memref<1x768xf32, #tpu.memory_space<any>>
    %c6_i32_19 = arith.constant 6 : i32
    %c0_i32_20 = arith.constant 0 : i32
    %32 = tpu.memref_slice %arg9[%c6_i32_19, %c0_i32_20] : memref<16x768xf32, #tpu.memory_space<vmem>> -> memref<1x768xf32, #tpu.memory_space<vmem>>
    %33 = tpu.memref_slice %arg10[%c6_i32] : memref<16x!tpu.dma_semaphore, #tpu.memory_space<semaphore_mem>> -> memref<1x!tpu.dma_semaphore, #tpu.memory_space<semaphore_mem>>
    %34 = tpu.memref_squeeze %33 : memref<1x!tpu.dma_semaphore, #tpu.memory_space<semaphore_mem>> -> memref<!tpu.dma_semaphore, #tpu.memory_space<semaphore_mem>>
    tpu.enqueue_dma source(%31 : memref<1x768xf32, #tpu.memory_space<any>>) target(%32 : memref<1x768xf32, #tpu.memory_space<vmem>>) target_semaphore(%34 : memref<!tpu.dma_semaphore, #tpu.memory_space<semaphore_mem>>)
    %c7 = arith.constant 7 : index
    %35 = memref.load %arg1[%c7] : memref<16xi32, #tpu.memory_space<smem>>
    %c7_i32 = arith.constant 7 : i32
    %c0_i32_21 = arith.constant 0 : i32
    %36 = tpu.memref_slice %arg2[%35, %c0_i32_21] : memref<256x768xf32, #tpu.memory_space<any>> -> memref<1x768xf32, #tpu.memory_space<any>>
    %c7_i32_22 = arith.constant 7 : i32
    %c0_i32_23 = arith.constant 0 : i32
    %37 = tpu.memref_slice %arg9[%c7_i32_22, %c0_i32_23] : memref<16x768xf32, #tpu.memory_space<vmem>> -> memref<1x768xf32, #tpu.memory_space<vmem>>
    %38 = tpu.memref_slice %arg10[%c7_i32] : memref<16x!tpu.dma_semaphore, #tpu.memory_space<semaphore_mem>> -> memref<1x!tpu.dma_semaphore, #tpu.memory_space<semaphore_mem>>
    %39 = tpu.memref_squeeze %38 : memref<1x!tpu.dma_semaphore, #tpu.memory_space<semaphore_mem>> -> memref<!tpu.dma_semaphore, #tpu.memory_space<semaphore_mem>>
    tpu.enqueue_dma source(%36 : memref<1x768xf32, #tpu.memory_space<any>>) target(%37 : memref<1x768xf32, #tpu.memory_space<vmem>>) target_semaphore(%39 : memref<!tpu.dma_semaphore, #tpu.memory_space<semaphore_mem>>)
    %c8 = arith.constant 8 : index
    %40 = memref.load %arg1[%c8] : memref<16xi32, #tpu.memory_space<smem>>
    %c8_i32 = arith.constant 8 : i32
    %c0_i32_24 = arith.constant 0 : i32
    %41 = tpu.memref_slice %arg2[%40, %c0_i32_24] : memref<256x768xf32, #tpu.memory_space<any>> -> memref<1x768xf32, #tpu.memory_space<any>>
    %c8_i32_25 = arith.constant 8 : i32
    %c0_i32_26 = arith.constant 0 : i32
    %42 = tpu.memref_slice %arg9[%c8_i32_25, %c0_i32_26] : memref<16x768xf32, #tpu.memory_space<vmem>> -> memref<1x768xf32, #tpu.memory_space<vmem>>
    %43 = tpu.memref_slice %arg10[%c8_i32] : memref<16x!tpu.dma_semaphore, #tpu.memory_space<semaphore_mem>> -> memref<1x!tpu.dma_semaphore, #tpu.memory_space<semaphore_mem>>
    %44 = tpu.memref_squeeze %43 : memref<1x!tpu.dma_semaphore, #tpu.memory_space<semaphore_mem>> -> memref<!tpu.dma_semaphore, #tpu.memory_space<semaphore_mem>>
    tpu.enqueue_dma source(%41 : memref<1x768xf32, #tpu.memory_space<any>>) target(%42 : memref<1x768xf32, #tpu.memory_space<vmem>>) target_semaphore(%44 : memref<!tpu.dma_semaphore, #tpu.memory_space<semaphore_mem>>)
    %c9 = arith.constant 9 : index
    %45 = memref.load %arg1[%c9] : memref<16xi32, #tpu.memory_space<smem>>
    %c9_i32 = arith.constant 9 : i32
    %c0_i32_27 = arith.constant 0 : i32
    %46 = tpu.memref_slice %arg2[%45, %c0_i32_27] : memref<256x768xf32, #tpu.memory_space<any>> -> memref<1x768xf32, #tpu.memory_space<any>>
    %c9_i32_28 = arith.constant 9 : i32
    %c0_i32_29 = arith.constant 0 : i32
    %47 = tpu.memref_slice %arg9[%c9_i32_28, %c0_i32_29] : memref<16x768xf32, #tpu.memory_space<vmem>> -> memref<1x768xf32, #tpu.memory_space<vmem>>
    %48 = tpu.memref_slice %arg10[%c9_i32] : memref<16x!tpu.dma_semaphore, #tpu.memory_space<semaphore_mem>> -> memref<1x!tpu.dma_semaphore, #tpu.memory_space<semaphore_mem>>
    %49 = tpu.memref_squeeze %48 : memref<1x!tpu.dma_semaphore, #tpu.memory_space<semaphore_mem>> -> memref<!tpu.dma_semaphore, #tpu.memory_space<semaphore_mem>>
    tpu.enqueue_dma source(%46 : memref<1x768xf32, #tpu.memory_space<any>>) target(%47 : memref<1x768xf32, #tpu.memory_space<vmem>>) target_semaphore(%49 : memref<!tpu.dma_semaphore, #tpu.memory_space<semaphore_mem>>)
    %c10 = arith.constant 10 : index
    %50 = memref.load %arg1[%c10] : memref<16xi32, #tpu.memory_space<smem>>
    %c10_i32 = arith.constant 10 : i32
    %c0_i32_30 = arith.constant 0 : i32
    %51 = tpu.memref_slice %arg2[%50, %c0_i32_30] : memref<256x768xf32, #tpu.memory_space<any>> -> memref<1x768xf32, #tpu.memory_space<any>>
    %c10_i32_31 = arith.constant 10 : i32
    %c0_i32_32 = arith.constant 0 : i32
    %52 = tpu.memref_slice %arg9[%c10_i32_31, %c0_i32_32] : memref<16x768xf32, #tpu.memory_space<vmem>> -> memref<1x768xf32, #tpu.memory_space<vmem>>
    %53 = tpu.memref_slice %arg10[%c10_i32] : memref<16x!tpu.dma_semaphore, #tpu.memory_space<semaphore_mem>> -> memref<1x!tpu.dma_semaphore, #tpu.memory_space<semaphore_mem>>
    %54 = tpu.memref_squeeze %53 : memref<1x!tpu.dma_semaphore, #tpu.memory_space<semaphore_mem>> -> memref<!tpu.dma_semaphore, #tpu.memory_space<semaphore_mem>>
    tpu.enqueue_dma source(%51 : memref<1x768xf32, #tpu.memory_space<any>>) target(%52 : memref<1x768xf32, #tpu.memory_space<vmem>>) target_semaphore(%54 : memref<!tpu.dma_semaphore, #tpu.memory_space<semaphore_mem>>)
    %c11 = arith.constant 11 : index
    %55 = memref.load %arg1[%c11] : memref<16xi32, #tpu.memory_space<smem>>
    %c11_i32 = arith.constant 11 : i32
    %c0_i32_33 = arith.constant 0 : i32
    %56 = tpu.memref_slice %arg2[%55, %c0_i32_33] : memref<256x768xf32, #tpu.memory_space<any>> -> memref<1x768xf32, #tpu.memory_space<any>>
    %c11_i32_34 = arith.constant 11 : i32
    %c0_i32_35 = arith.constant 0 : i32
    %57 = tpu.memref_slice %arg9[%c11_i32_34, %c0_i32_35] : memref<16x768xf32, #tpu.memory_space<vmem>> -> memref<1x768xf32, #tpu.memory_space<vmem>>
    %58 = tpu.memref_slice %arg10[%c11_i32] : memref<16x!tpu.dma_semaphore, #tpu.memory_space<semaphore_mem>> -> memref<1x!tpu.dma_semaphore, #tpu.memory_space<semaphore_mem>>
    %59 = tpu.memref_squeeze %58 : memref<1x!tpu.dma_semaphore, #tpu.memory_space<semaphore_mem>> -> memref<!tpu.dma_semaphore, #tpu.memory_space<semaphore_mem>>
    tpu.enqueue_dma source(%56 : memref<1x768xf32, #tpu.memory_space<any>>) target(%57 : memref<1x768xf32, #tpu.memory_space<vmem>>) target_semaphore(%59 : memref<!tpu.dma_semaphore, #tpu.memory_space<semaphore_mem>>)
    %c12 = arith.constant 12 : index
    %60 = memref.load %arg1[%c12] : memref<16xi32, #tpu.memory_space<smem>>
    %c12_i32 = arith.constant 12 : i32
    %c0_i32_36 = arith.constant 0 : i32
    %61 = tpu.memref_slice %arg2[%60, %c0_i32_36] : memref<256x768xf32, #tpu.memory_space<any>> -> memref<1x768xf32, #tpu.memory_space<any>>
    %c12_i32_37 = arith.constant 12 : i32
    %c0_i32_38 = arith.constant 0 : i32
    %62 = tpu.memref_slice %arg9[%c12_i32_37, %c0_i32_38] : memref<16x768xf32, #tpu.memory_space<vmem>> -> memref<1x768xf32, #tpu.memory_space<vmem>>
    %63 = tpu.memref_slice %arg10[%c12_i32] : memref<16x!tpu.dma_semaphore, #tpu.memory_space<semaphore_mem>> -> memref<1x!tpu.dma_semaphore, #tpu.memory_space<semaphore_mem>>
    %64 = tpu.memref_squeeze %63 : memref<1x!tpu.dma_semaphore, #tpu.memory_space<semaphore_mem>> -> memref<!tpu.dma_semaphore, #tpu.memory_space<semaphore_mem>>
    tpu.enqueue_dma source(%61 : memref<1x768xf32, #tpu.memory_space<any>>) target(%62 : memref<1x768xf32, #tpu.memory_space<vmem>>) target_semaphore(%64 : memref<!tpu.dma_semaphore, #tpu.memory_space<semaphore_mem>>)
    %c13 = arith.constant 13 : index
    %65 = memref.load %arg1[%c13] : memref<16xi32, #tpu.memory_space<smem>>
    %c13_i32 = arith.constant 13 : i32
    %c0_i32_39 = arith.constant 0 : i32
    %66 = tpu.memref_slice %arg2[%65, %c0_i32_39] : memref<256x768xf32, #tpu.memory_space<any>> -> memref<1x768xf32, #tpu.memory_space<any>>
    %c13_i32_40 = arith.constant 13 : i32
    %c0_i32_41 = arith.constant 0 : i32
    %67 = tpu.memref_slice %arg9[%c13_i32_40, %c0_i32_41] : memref<16x768xf32, #tpu.memory_space<vmem>> -> memref<1x768xf32, #tpu.memory_space<vmem>>
    %68 = tpu.memref_slice %arg10[%c13_i32] : memref<16x!tpu.dma_semaphore, #tpu.memory_space<semaphore_mem>> -> memref<1x!tpu.dma_semaphore, #tpu.memory_space<semaphore_mem>>
    %69 = tpu.memref_squeeze %68 : memref<1x!tpu.dma_semaphore, #tpu.memory_space<semaphore_mem>> -> memref<!tpu.dma_semaphore, #tpu.memory_space<semaphore_mem>>
    tpu.enqueue_dma source(%66 : memref<1x768xf32, #tpu.memory_space<any>>) target(%67 : memref<1x768xf32, #tpu.memory_space<vmem>>) target_semaphore(%69 : memref<!tpu.dma_semaphore, #tpu.memory_space<semaphore_mem>>)
    %c14 = arith.constant 14 : index
    %70 = memref.load %arg1[%c14] : memref<16xi32, #tpu.memory_space<smem>>
    %c14_i32 = arith.constant 14 : i32
    %c0_i32_42 = arith.constant 0 : i32
    %71 = tpu.memref_slice %arg2[%70, %c0_i32_42] : memref<256x768xf32, #tpu.memory_space<any>> -> memref<1x768xf32, #tpu.memory_space<any>>
    %c14_i32_43 = arith.constant 14 : i32
    %c0_i32_44 = arith.constant 0 : i32
    %72 = tpu.memref_slice %arg9[%c14_i32_43, %c0_i32_44] : memref<16x768xf32, #tpu.memory_space<vmem>> -> memref<1x768xf32, #tpu.memory_space<vmem>>
    %73 = tpu.memref_slice %arg10[%c14_i32] : memref<16x!tpu.dma_semaphore, #tpu.memory_space<semaphore_mem>> -> memref<1x!tpu.dma_semaphore, #tpu.memory_space<semaphore_mem>>
    %74 = tpu.memref_squeeze %73 : memref<1x!tpu.dma_semaphore, #tpu.memory_space<semaphore_mem>> -> memref<!tpu.dma_semaphore, #tpu.memory_space<semaphore_mem>>
    tpu.enqueue_dma source(%71 : memref<1x768xf32, #tpu.memory_space<any>>) target(%72 : memref<1x768xf32, #tpu.memory_space<vmem>>) target_semaphore(%74 : memref<!tpu.dma_semaphore, #tpu.memory_space<semaphore_mem>>)
    %c15 = arith.constant 15 : index
    %75 = memref.load %arg1[%c15] : memref<16xi32, #tpu.memory_space<smem>>
    %c15_i32 = arith.constant 15 : i32
    %c0_i32_45 = arith.constant 0 : i32
    %76 = tpu.memref_slice %arg2[%75, %c0_i32_45] : memref<256x768xf32, #tpu.memory_space<any>> -> memref<1x768xf32, #tpu.memory_space<any>>
    %c15_i32_46 = arith.constant 15 : i32
    %c0_i32_47 = arith.constant 0 : i32
    %77 = tpu.memref_slice %arg9[%c15_i32_46, %c0_i32_47] : memref<16x768xf32, #tpu.memory_space<vmem>> -> memref<1x768xf32, #tpu.memory_space<vmem>>
    %78 = tpu.memref_slice %arg10[%c15_i32] : memref<16x!tpu.dma_semaphore, #tpu.memory_space<semaphore_mem>> -> memref<1x!tpu.dma_semaphore, #tpu.memory_space<semaphore_mem>>
    %79 = tpu.memref_squeeze %78 : memref<1x!tpu.dma_semaphore, #tpu.memory_space<semaphore_mem>> -> memref<!tpu.dma_semaphore, #tpu.memory_space<semaphore_mem>>
    tpu.enqueue_dma source(%76 : memref<1x768xf32, #tpu.memory_space<any>>) target(%77 : memref<1x768xf32, #tpu.memory_space<vmem>>) target_semaphore(%79 : memref<!tpu.dma_semaphore, #tpu.memory_space<semaphore_mem>>)
    %c0_48 = arith.constant 0 : index
    %80 = memref.load %arg1[%c0_48] : memref<16xi32, #tpu.memory_space<smem>>
    %c0_i32_49 = arith.constant 0 : i32
    %c0_i32_50 = arith.constant 0 : i32
    %81 = tpu.memref_slice %arg2[%80, %c0_i32_50] : memref<256x768xf32, #tpu.memory_space<any>> -> memref<1x768xf32, #tpu.memory_space<any>>
    %c0_i32_51 = arith.constant 0 : i32
    %c0_i32_52 = arith.constant 0 : i32
    %82 = tpu.memref_slice %arg9[%c0_i32_51, %c0_i32_52] : memref<16x768xf32, #tpu.memory_space<vmem>> -> memref<1x768xf32, #tpu.memory_space<vmem>>
    %83 = tpu.memref_slice %arg10[%c0_i32_49] : memref<16x!tpu.dma_semaphore, #tpu.memory_space<semaphore_mem>> -> memref<1x!tpu.dma_semaphore, #tpu.memory_space<semaphore_mem>>
    %84 = tpu.memref_squeeze %83 : memref<1x!tpu.dma_semaphore, #tpu.memory_space<semaphore_mem>> -> memref<!tpu.dma_semaphore, #tpu.memory_space<semaphore_mem>>
    tpu.wait_dma2 semaphore(%84 : memref<!tpu.dma_semaphore, #tpu.memory_space<semaphore_mem>>) src(%81 : memref<1x768xf32, #tpu.memory_space<any>>) dst(%82 : memref<1x768xf32, #tpu.memory_space<vmem>>)
    %c1_53 = arith.constant 1 : index
    %85 = memref.load %arg1[%c1_53] : memref<16xi32, #tpu.memory_space<smem>>
    %c1_i32_54 = arith.constant 1 : i32
    %c0_i32_55 = arith.constant 0 : i32
    %86 = tpu.memref_slice %arg2[%85, %c0_i32_55] : memref<256x768xf32, #tpu.memory_space<any>> -> memref<1x768xf32, #tpu.memory_space<any>>
    %c1_i32_56 = arith.constant 1 : i32
    %c0_i32_57 = arith.constant 0 : i32
    %87 = tpu.memref_slice %arg9[%c1_i32_56, %c0_i32_57] : memref<16x768xf32, #tpu.memory_space<vmem>> -> memref<1x768xf32, #tpu.memory_space<vmem>>
    %88 = tpu.memref_slice %arg10[%c1_i32_54] : memref<16x!tpu.dma_semaphore, #tpu.memory_space<semaphore_mem>> -> memref<1x!tpu.dma_semaphore, #tpu.memory_space<semaphore_mem>>
    %89 = tpu.memref_squeeze %88 : memref<1x!tpu.dma_semaphore, #tpu.memory_space<semaphore_mem>> -> memref<!tpu.dma_semaphore, #tpu.memory_space<semaphore_mem>>
    tpu.wait_dma2 semaphore(%89 : memref<!tpu.dma_semaphore, #tpu.memory_space<semaphore_mem>>) src(%86 : memref<1x768xf32, #tpu.memory_space<any>>) dst(%87 : memref<1x768xf32, #tpu.memory_space<vmem>>)
    %c2_58 = arith.constant 2 : index
    %90 = memref.load %arg1[%c2_58] : memref<16xi32, #tpu.memory_space<smem>>
    %c2_i32_59 = arith.constant 2 : i32
    %c0_i32_60 = arith.constant 0 : i32
    %91 = tpu.memref_slice %arg2[%90, %c0_i32_60] : memref<256x768xf32, #tpu.memory_space<any>> -> memref<1x768xf32, #tpu.memory_space<any>>
    %c2_i32_61 = arith.constant 2 : i32
    %c0_i32_62 = arith.constant 0 : i32
    %92 = tpu.memref_slice %arg9[%c2_i32_61, %c0_i32_62] : memref<16x768xf32, #tpu.memory_space<vmem>> -> memref<1x768xf32, #tpu.memory_space<vmem>>
    %93 = tpu.memref_slice %arg10[%c2_i32_59] : memref<16x!tpu.dma_semaphore, #tpu.memory_space<semaphore_mem>> -> memref<1x!tpu.dma_semaphore, #tpu.memory_space<semaphore_mem>>
    %94 = tpu.memref_squeeze %93 : memref<1x!tpu.dma_semaphore, #tpu.memory_space<semaphore_mem>> -> memref<!tpu.dma_semaphore, #tpu.memory_space<semaphore_mem>>
    tpu.wait_dma2 semaphore(%94 : memref<!tpu.dma_semaphore, #tpu.memory_space<semaphore_mem>>) src(%91 : memref<1x768xf32, #tpu.memory_space<any>>) dst(%92 : memref<1x768xf32, #tpu.memory_space<vmem>>)
    %c3_63 = arith.constant 3 : index
    %95 = memref.load %arg1[%c3_63] : memref<16xi32, #tpu.memory_space<smem>>
    %c3_i32_64 = arith.constant 3 : i32
    %c0_i32_65 = arith.constant 0 : i32
    %96 = tpu.memref_slice %arg2[%95, %c0_i32_65] : memref<256x768xf32, #tpu.memory_space<any>> -> memref<1x768xf32, #tpu.memory_space<any>>
    %c3_i32_66 = arith.constant 3 : i32
    %c0_i32_67 = arith.constant 0 : i32
    %97 = tpu.memref_slice %arg9[%c3_i32_66, %c0_i32_67] : memref<16x768xf32, #tpu.memory_space<vmem>> -> memref<1x768xf32, #tpu.memory_space<vmem>>
    %98 = tpu.memref_slice %arg10[%c3_i32_64] : memref<16x!tpu.dma_semaphore, #tpu.memory_space<semaphore_mem>> -> memref<1x!tpu.dma_semaphore, #tpu.memory_space<semaphore_mem>>
    %99 = tpu.memref_squeeze %98 : memref<1x!tpu.dma_semaphore, #tpu.memory_space<semaphore_mem>> -> memref<!tpu.dma_semaphore, #tpu.memory_space<semaphore_mem>>
    tpu.wait_dma2 semaphore(%99 : memref<!tpu.dma_semaphore, #tpu.memory_space<semaphore_mem>>) src(%96 : memref<1x768xf32, #tpu.memory_space<any>>) dst(%97 : memref<1x768xf32, #tpu.memory_space<vmem>>)
    %c4_68 = arith.constant 4 : index
    %100 = memref.load %arg1[%c4_68] : memref<16xi32, #tpu.memory_space<smem>>
    %c4_i32_69 = arith.constant 4 : i32
    %c0_i32_70 = arith.constant 0 : i32
    %101 = tpu.memref_slice %arg2[%100, %c0_i32_70] : memref<256x768xf32, #tpu.memory_space<any>> -> memref<1x768xf32, #tpu.memory_space<any>>
    %c4_i32_71 = arith.constant 4 : i32
    %c0_i32_72 = arith.constant 0 : i32
    %102 = tpu.memref_slice %arg9[%c4_i32_71, %c0_i32_72] : memref<16x768xf32, #tpu.memory_space<vmem>> -> memref<1x768xf32, #tpu.memory_space<vmem>>
    %103 = tpu.memref_slice %arg10[%c4_i32_69] : memref<16x!tpu.dma_semaphore, #tpu.memory_space<semaphore_mem>> -> memref<1x!tpu.dma_semaphore, #tpu.memory_space<semaphore_mem>>
    %104 = tpu.memref_squeeze %103 : memref<1x!tpu.dma_semaphore, #tpu.memory_space<semaphore_mem>> -> memref<!tpu.dma_semaphore, #tpu.memory_space<semaphore_mem>>
    tpu.wait_dma2 semaphore(%104 : memref<!tpu.dma_semaphore, #tpu.memory_space<semaphore_mem>>) src(%101 : memref<1x768xf32, #tpu.memory_space<any>>) dst(%102 : memref<1x768xf32, #tpu.memory_space<vmem>>)
    %c5_73 = arith.constant 5 : index
    %105 = memref.load %arg1[%c5_73] : memref<16xi32, #tpu.memory_space<smem>>
    %c5_i32_74 = arith.constant 5 : i32
    %c0_i32_75 = arith.constant 0 : i32
    %106 = tpu.memref_slice %arg2[%105, %c0_i32_75] : memref<256x768xf32, #tpu.memory_space<any>> -> memref<1x768xf32, #tpu.memory_space<any>>
    %c5_i32_76 = arith.constant 5 : i32
    %c0_i32_77 = arith.constant 0 : i32
    %107 = tpu.memref_slice %arg9[%c5_i32_76, %c0_i32_77] : memref<16x768xf32, #tpu.memory_space<vmem>> -> memref<1x768xf32, #tpu.memory_space<vmem>>
    %108 = tpu.memref_slice %arg10[%c5_i32_74] : memref<16x!tpu.dma_semaphore, #tpu.memory_space<semaphore_mem>> -> memref<1x!tpu.dma_semaphore, #tpu.memory_space<semaphore_mem>>
    %109 = tpu.memref_squeeze %108 : memref<1x!tpu.dma_semaphore, #tpu.memory_space<semaphore_mem>> -> memref<!tpu.dma_semaphore, #tpu.memory_space<semaphore_mem>>
    tpu.wait_dma2 semaphore(%109 : memref<!tpu.dma_semaphore, #tpu.memory_space<semaphore_mem>>) src(%106 : memref<1x768xf32, #tpu.memory_space<any>>) dst(%107 : memref<1x768xf32, #tpu.memory_space<vmem>>)
    %c6_78 = arith.constant 6 : index
    %110 = memref.load %arg1[%c6_78] : memref<16xi32, #tpu.memory_space<smem>>
    %c6_i32_79 = arith.constant 6 : i32
    %c0_i32_80 = arith.constant 0 : i32
    %111 = tpu.memref_slice %arg2[%110, %c0_i32_80] : memref<256x768xf32, #tpu.memory_space<any>> -> memref<1x768xf32, #tpu.memory_space<any>>
    %c6_i32_81 = arith.constant 6 : i32
    %c0_i32_82 = arith.constant 0 : i32
    %112 = tpu.memref_slice %arg9[%c6_i32_81, %c0_i32_82] : memref<16x768xf32, #tpu.memory_space<vmem>> -> memref<1x768xf32, #tpu.memory_space<vmem>>
    %113 = tpu.memref_slice %arg10[%c6_i32_79] : memref<16x!tpu.dma_semaphore, #tpu.memory_space<semaphore_mem>> -> memref<1x!tpu.dma_semaphore, #tpu.memory_space<semaphore_mem>>
    %114 = tpu.memref_squeeze %113 : memref<1x!tpu.dma_semaphore, #tpu.memory_space<semaphore_mem>> -> memref<!tpu.dma_semaphore, #tpu.memory_space<semaphore_mem>>
    tpu.wait_dma2 semaphore(%114 : memref<!tpu.dma_semaphore, #tpu.memory_space<semaphore_mem>>) src(%111 : memref<1x768xf32, #tpu.memory_space<any>>) dst(%112 : memref<1x768xf32, #tpu.memory_space<vmem>>)
    %c7_83 = arith.constant 7 : index
    %115 = memref.load %arg1[%c7_83] : memref<16xi32, #tpu.memory_space<smem>>
    %c7_i32_84 = arith.constant 7 : i32
    %c0_i32_85 = arith.constant 0 : i32
    %116 = tpu.memref_slice %arg2[%115, %c0_i32_85] : memref<256x768xf32, #tpu.memory_space<any>> -> memref<1x768xf32, #tpu.memory_space<any>>
    %c7_i32_86 = arith.constant 7 : i32
    %c0_i32_87 = arith.constant 0 : i32
    %117 = tpu.memref_slice %arg9[%c7_i32_86, %c0_i32_87] : memref<16x768xf32, #tpu.memory_space<vmem>> -> memref<1x768xf32, #tpu.memory_space<vmem>>
    %118 = tpu.memref_slice %arg10[%c7_i32_84] : memref<16x!tpu.dma_semaphore, #tpu.memory_space<semaphore_mem>> -> memref<1x!tpu.dma_semaphore, #tpu.memory_space<semaphore_mem>>
    %119 = tpu.memref_squeeze %118 : memref<1x!tpu.dma_semaphore, #tpu.memory_space<semaphore_mem>> -> memref<!tpu.dma_semaphore, #tpu.memory_space<semaphore_mem>>
    tpu.wait_dma2 semaphore(%119 : memref<!tpu.dma_semaphore, #tpu.memory_space<semaphore_mem>>) src(%116 : memref<1x768xf32, #tpu.memory_space<any>>) dst(%117 : memref<1x768xf32, #tpu.memory_space<vmem>>)
    %c8_88 = arith.constant 8 : index
    %120 = memref.load %arg1[%c8_88] : memref<16xi32, #tpu.memory_space<smem>>
    %c8_i32_89 = arith.constant 8 : i32
    %c0_i32_90 = arith.constant 0 : i32
    %121 = tpu.memref_slice %arg2[%120, %c0_i32_90] : memref<256x768xf32, #tpu.memory_space<any>> -> memref<1x768xf32, #tpu.memory_space<any>>
    %c8_i32_91 = arith.constant 8 : i32
    %c0_i32_92 = arith.constant 0 : i32
    %122 = tpu.memref_slice %arg9[%c8_i32_91, %c0_i32_92] : memref<16x768xf32, #tpu.memory_space<vmem>> -> memref<1x768xf32, #tpu.memory_space<vmem>>
    %123 = tpu.memref_slice %arg10[%c8_i32_89] : memref<16x!tpu.dma_semaphore, #tpu.memory_space<semaphore_mem>> -> memref<1x!tpu.dma_semaphore, #tpu.memory_space<semaphore_mem>>
    %124 = tpu.memref_squeeze %123 : memref<1x!tpu.dma_semaphore, #tpu.memory_space<semaphore_mem>> -> memref<!tpu.dma_semaphore, #tpu.memory_space<semaphore_mem>>
    tpu.wait_dma2 semaphore(%124 : memref<!tpu.dma_semaphore, #tpu.memory_space<semaphore_mem>>) src(%121 : memref<1x768xf32, #tpu.memory_space<any>>) dst(%122 : memref<1x768xf32, #tpu.memory_space<vmem>>)
    %c9_93 = arith.constant 9 : index
    %125 = memref.load %arg1[%c9_93] : memref<16xi32, #tpu.memory_space<smem>>
    %c9_i32_94 = arith.constant 9 : i32
    %c0_i32_95 = arith.constant 0 : i32
    %126 = tpu.memref_slice %arg2[%125, %c0_i32_95] : memref<256x768xf32, #tpu.memory_space<any>> -> memref<1x768xf32, #tpu.memory_space<any>>
    %c9_i32_96 = arith.constant 9 : i32
    %c0_i32_97 = arith.constant 0 : i32
    %127 = tpu.memref_slice %arg9[%c9_i32_96, %c0_i32_97] : memref<16x768xf32, #tpu.memory_space<vmem>> -> memref<1x768xf32, #tpu.memory_space<vmem>>
    %128 = tpu.memref_slice %arg10[%c9_i32_94] : memref<16x!tpu.dma_semaphore, #tpu.memory_space<semaphore_mem>> -> memref<1x!tpu.dma_semaphore, #tpu.memory_space<semaphore_mem>>
    %129 = tpu.memref_squeeze %128 : memref<1x!tpu.dma_semaphore, #tpu.memory_space<semaphore_mem>> -> memref<!tpu.dma_semaphore, #tpu.memory_space<semaphore_mem>>
    tpu.wait_dma2 semaphore(%129 : memref<!tpu.dma_semaphore, #tpu.memory_space<semaphore_mem>>) src(%126 : memref<1x768xf32, #tpu.memory_space<any>>) dst(%127 : memref<1x768xf32, #tpu.memory_space<vmem>>)
    %c10_98 = arith.constant 10 : index
    %130 = memref.load %arg1[%c10_98] : memref<16xi32, #tpu.memory_space<smem>>
    %c10_i32_99 = arith.constant 10 : i32
    %c0_i32_100 = arith.constant 0 : i32
    %131 = tpu.memref_slice %arg2[%130, %c0_i32_100] : memref<256x768xf32, #tpu.memory_space<any>> -> memref<1x768xf32, #tpu.memory_space<any>>
    %c10_i32_101 = arith.constant 10 : i32
    %c0_i32_102 = arith.constant 0 : i32
    %132 = tpu.memref_slice %arg9[%c10_i32_101, %c0_i32_102] : memref<16x768xf32, #tpu.memory_space<vmem>> -> memref<1x768xf32, #tpu.memory_space<vmem>>
    %133 = tpu.memref_slice %arg10[%c10_i32_99] : memref<16x!tpu.dma_semaphore, #tpu.memory_space<semaphore_mem>> -> memref<1x!tpu.dma_semaphore, #tpu.memory_space<semaphore_mem>>
    %134 = tpu.memref_squeeze %133 : memref<1x!tpu.dma_semaphore, #tpu.memory_space<semaphore_mem>> -> memref<!tpu.dma_semaphore, #tpu.memory_space<semaphore_mem>>
    tpu.wait_dma2 semaphore(%134 : memref<!tpu.dma_semaphore, #tpu.memory_space<semaphore_mem>>) src(%131 : memref<1x768xf32, #tpu.memory_space<any>>) dst(%132 : memref<1x768xf32, #tpu.memory_space<vmem>>)
    %c11_103 = arith.constant 11 : index
    %135 = memref.load %arg1[%c11_103] : memref<16xi32, #tpu.memory_space<smem>>
    %c11_i32_104 = arith.constant 11 : i32
    %c0_i32_105 = arith.constant 0 : i32
    %136 = tpu.memref_slice %arg2[%135, %c0_i32_105] : memref<256x768xf32, #tpu.memory_space<any>> -> memref<1x768xf32, #tpu.memory_space<any>>
    %c11_i32_106 = arith.constant 11 : i32
    %c0_i32_107 = arith.constant 0 : i32
    %137 = tpu.memref_slice %arg9[%c11_i32_106, %c0_i32_107] : memref<16x768xf32, #tpu.memory_space<vmem>> -> memref<1x768xf32, #tpu.memory_space<vmem>>
    %138 = tpu.memref_slice %arg10[%c11_i32_104] : memref<16x!tpu.dma_semaphore, #tpu.memory_space<semaphore_mem>> -> memref<1x!tpu.dma_semaphore, #tpu.memory_space<semaphore_mem>>
    %139 = tpu.memref_squeeze %138 : memref<1x!tpu.dma_semaphore, #tpu.memory_space<semaphore_mem>> -> memref<!tpu.dma_semaphore, #tpu.memory_space<semaphore_mem>>
    tpu.wait_dma2 semaphore(%139 : memref<!tpu.dma_semaphore, #tpu.memory_space<semaphore_mem>>) src(%136 : memref<1x768xf32, #tpu.memory_space<any>>) dst(%137 : memref<1x768xf32, #tpu.memory_space<vmem>>)
    %c12_108 = arith.constant 12 : index
    %140 = memref.load %arg1[%c12_108] : memref<16xi32, #tpu.memory_space<smem>>
    %c12_i32_109 = arith.constant 12 : i32
    %c0_i32_110 = arith.constant 0 : i32
    %141 = tpu.memref_slice %arg2[%140, %c0_i32_110] : memref<256x768xf32, #tpu.memory_space<any>> -> memref<1x768xf32, #tpu.memory_space<any>>
    %c12_i32_111 = arith.constant 12 : i32
    %c0_i32_112 = arith.constant 0 : i32
    %142 = tpu.memref_slice %arg9[%c12_i32_111, %c0_i32_112] : memref<16x768xf32, #tpu.memory_space<vmem>> -> memref<1x768xf32, #tpu.memory_space<vmem>>
    %143 = tpu.memref_slice %arg10[%c12_i32_109] : memref<16x!tpu.dma_semaphore, #tpu.memory_space<semaphore_mem>> -> memref<1x!tpu.dma_semaphore, #tpu.memory_space<semaphore_mem>>
    %144 = tpu.memref_squeeze %143 : memref<1x!tpu.dma_semaphore, #tpu.memory_space<semaphore_mem>> -> memref<!tpu.dma_semaphore, #tpu.memory_space<semaphore_mem>>
    tpu.wait_dma2 semaphore(%144 : memref<!tpu.dma_semaphore, #tpu.memory_space<semaphore_mem>>) src(%141 : memref<1x768xf32, #tpu.memory_space<any>>) dst(%142 : memref<1x768xf32, #tpu.memory_space<vmem>>)
    %c13_113 = arith.constant 13 : index
    %145 = memref.load %arg1[%c13_113] : memref<16xi32, #tpu.memory_space<smem>>
    %c13_i32_114 = arith.constant 13 : i32
    %c0_i32_115 = arith.constant 0 : i32
    %146 = tpu.memref_slice %arg2[%145, %c0_i32_115] : memref<256x768xf32, #tpu.memory_space<any>> -> memref<1x768xf32, #tpu.memory_space<any>>
    %c13_i32_116 = arith.constant 13 : i32
    %c0_i32_117 = arith.constant 0 : i32
    %147 = tpu.memref_slice %arg9[%c13_i32_116, %c0_i32_117] : memref<16x768xf32, #tpu.memory_space<vmem>> -> memref<1x768xf32, #tpu.memory_space<vmem>>
    %148 = tpu.memref_slice %arg10[%c13_i32_114] : memref<16x!tpu.dma_semaphore, #tpu.memory_space<semaphore_mem>> -> memref<1x!tpu.dma_semaphore, #tpu.memory_space<semaphore_mem>>
    %149 = tpu.memref_squeeze %148 : memref<1x!tpu.dma_semaphore, #tpu.memory_space<semaphore_mem>> -> memref<!tpu.dma_semaphore, #tpu.memory_space<semaphore_mem>>
    tpu.wait_dma2 semaphore(%149 : memref<!tpu.dma_semaphore, #tpu.memory_space<semaphore_mem>>) src(%146 : memref<1x768xf32, #tpu.memory_space<any>>) dst(%147 : memref<1x768xf32, #tpu.memory_space<vmem>>)
    %c14_118 = arith.constant 14 : index
    %150 = memref.load %arg1[%c14_118] : memref<16xi32, #tpu.memory_space<smem>>
    %c14_i32_119 = arith.constant 14 : i32
    %c0_i32_120 = arith.constant 0 : i32
    %151 = tpu.memref_slice %arg2[%150, %c0_i32_120] : memref<256x768xf32, #tpu.memory_space<any>> -> memref<1x768xf32, #tpu.memory_space<any>>
    %c14_i32_121 = arith.constant 14 : i32
    %c0_i32_122 = arith.constant 0 : i32
    %152 = tpu.memref_slice %arg9[%c14_i32_121, %c0_i32_122] : memref<16x768xf32, #tpu.memory_space<vmem>> -> memref<1x768xf32, #tpu.memory_space<vmem>>
    %153 = tpu.memref_slice %arg10[%c14_i32_119] : memref<16x!tpu.dma_semaphore, #tpu.memory_space<semaphore_mem>> -> memref<1x!tpu.dma_semaphore, #tpu.memory_space<semaphore_mem>>
    %154 = tpu.memref_squeeze %153 : memref<1x!tpu.dma_semaphore, #tpu.memory_space<semaphore_mem>> -> memref<!tpu.dma_semaphore, #tpu.memory_space<semaphore_mem>>
    tpu.wait_dma2 semaphore(%154 : memref<!tpu.dma_semaphore, #tpu.memory_space<semaphore_mem>>) src(%151 : memref<1x768xf32, #tpu.memory_space<any>>) dst(%152 : memref<1x768xf32, #tpu.memory_space<vmem>>)
    %c15_123 = arith.constant 15 : index
    %155 = memref.load %arg1[%c15_123] : memref<16xi32, #tpu.memory_space<smem>>
    %c15_i32_124 = arith.constant 15 : i32
    %c0_i32_125 = arith.constant 0 : i32
    %156 = tpu.memref_slice %arg2[%155, %c0_i32_125] : memref<256x768xf32, #tpu.memory_space<any>> -> memref<1x768xf32, #tpu.memory_space<any>>
    %c15_i32_126 = arith.constant 15 : i32
    %c0_i32_127 = arith.constant 0 : i32
    %157 = tpu.memref_slice %arg9[%c15_i32_126, %c0_i32_127] : memref<16x768xf32, #tpu.memory_space<vmem>> -> memref<1x768xf32, #tpu.memory_space<vmem>>
    %158 = tpu.memref_slice %arg10[%c15_i32_124] : memref<16x!tpu.dma_semaphore, #tpu.memory_space<semaphore_mem>> -> memref<1x!tpu.dma_semaphore, #tpu.memory_space<semaphore_mem>>
    %159 = tpu.memref_squeeze %158 : memref<1x!tpu.dma_semaphore, #tpu.memory_space<semaphore_mem>> -> memref<!tpu.dma_semaphore, #tpu.memory_space<semaphore_mem>>
    tpu.wait_dma2 semaphore(%159 : memref<!tpu.dma_semaphore, #tpu.memory_space<semaphore_mem>>) src(%156 : memref<1x768xf32, #tpu.memory_space<any>>) dst(%157 : memref<1x768xf32, #tpu.memory_space<vmem>>)
    %c0_128 = arith.constant 0 : index
    %c0_129 = arith.constant 0 : index
    %160 = vector.load %arg9[%c0_128, %c0_129] : memref<16x768xf32, #tpu.memory_space<vmem>>, vector<16x768xf32>
    %c0_130 = arith.constant 0 : index
    %c0_131 = arith.constant 0 : index
    %161 = vector.load %arg3[%c0_130, %c0_131] : memref<1x768xf32, #tpu.memory_space<vmem>>, vector<1x768xf32>
    %162 = vector.broadcast %161 : vector<1x768xf32> to vector<16x768xf32>
    %163 = arith.mulf %160, %162 : vector<16x768xf32>
    %c0_132 = arith.constant 0 : index
    %c0_133 = arith.constant 0 : index
    %164 = vector.load %arg6[%c0_132, %c0_133] : memref<16x768xf32, #tpu.memory_space<vmem>>, vector<16x768xf32>
    tpu.vector_store %arg6[%c0_132, %c0_133], %163 {strides = array<i32>} : memref<16x768xf32, #tpu.memory_space<vmem>>, vector<16x768xf32>,
    %165 = arith.truncf %163 : vector<16x768xf32> to vector<16x768xbf16>
    %c0_134 = arith.constant 0 : index
    %c0_135 = arith.constant 0 : index
    %166 = vector.load %arg4[%c0_134, %c0_135] : memref<768x128xbf16, #tpu.memory_space<vmem>>, vector<768x128xbf16>
    %cst = arith.constant dense<0.000000e+00> : vector<16x128xf32>
    %167 = tpu.matmul %165, %166, %cst {dimension_numbers = #tpu.dot_dimension_numbers<[1], [0], [0], [1], [0, 0, 1, 1], [], []>} : vector<16x768xbf16>, vector<768x128xbf16>, vector<16x128xf32> -> vector<16x128xf32>
    %c0_136 = arith.constant 0 : index
    %c0_137 = arith.constant 0 : index
    %168 = vector.load %arg5[%c0_136, %c0_137] : memref<1x128xf32, #tpu.memory_space<vmem>>, vector<1x128xf32>
    %169 = vector.broadcast %168 : vector<1x128xf32> to vector<16x128xf32>
    %170 = arith.addf %167, %169 : vector<16x128xf32>
    %c0_138 = arith.constant 0 : index
    %c0_139 = arith.constant 0 : index
    %171 = vector.load %arg7[%c0_138, %c0_139] : memref<16x128xf32, #tpu.memory_space<vmem>>, vector<16x128xf32>
    tpu.vector_store %arg7[%c0_138, %c0_139], %170 {strides = array<i32>} : memref<16x128xf32, #tpu.memory_space<vmem>>, vector<16x128xf32>,
    %cst_140 = arith.constant dense<0xFF800000> : vector<16xf32>
    %172 = vector.multi_reduction <maximumf>, %170, %cst_140 [1] : vector<16x128xf32> to vector<16xf32>
    %173 = vector.shape_cast %172 : vector<16xf32> to vector<16x1xf32>
    %174 = tpu.iota {dimensions = array<i32: 1>} : vector<16x128xi32>
    %175 = vector.broadcast %173 : vector<16x1xf32> to vector<16x128xf32>
    %176 = arith.cmpf oeq, %170, %175 : vector<16x128xf32>
    %c128_i32 = arith.constant 128 : i32
    %177 = vector.broadcast %c128_i32 : i32 to vector<16x128xi32>
    %178 = arith.select %176, %174, %177 : vector<16x128xi1>, vector<16x128xi32>
    %cst_141 = arith.constant dense<2147483647> : vector<16xi32>
    %179 = vector.multi_reduction <minsi>, %178, %cst_141 [1] : vector<16x128xi32> to vector<16xi32>
    %180 = vector.shape_cast %179 : vector<16xi32> to vector<16x1xi32>
    %181 = vector.shape_cast %180 : vector<16x1xi32> to vector<16x1xi32>
    %182 = vector.broadcast %181 : vector<16x1xi32> to vector<16x128xi32>
    %c0_142 = arith.constant 0 : index
    %c0_143 = arith.constant 0 : index
    %183 = vector.load %arg8[%c0_142, %c0_143] : memref<16x128xi32, #tpu.memory_space<vmem>>, vector<16x128xi32>
    tpu.vector_store %arg8[%c0_142, %c0_143], %182 {strides = array<i32>} : memref<16x128xi32, #tpu.memory_space<vmem>>, vector<16x128xi32>,
    return
  }
  func.func @transform_1(%arg0: i32, %arg1: memref<16xi32, #tpu.memory_space<smem>>) -> (i32, i32) {
    %c0_i32 = arith.constant 0 : i32
    %c0_i32_0 = arith.constant 0 : i32
    %c0_i32_1 = arith.constant 0 : i32
    return %c0_i32, %c0_i32_0 : i32, i32
  }
  func.func @transform_2(%arg0: i32, %arg1: memref<16xi32, #tpu.memory_space<smem>>) -> (i32, i32) {
    %c0_i32 = arith.constant 0 : i32
    %c0_i32_0 = arith.constant 0 : i32
    %c0_i32_1 = arith.constant 0 : i32
    return %c0_i32, %c0_i32_0 : i32, i32
  }
  func.func @transform_3(%arg0: i32, %arg1: memref<16xi32, #tpu.memory_space<smem>>) -> (i32, i32) {
    %c0_i32 = arith.constant 0 : i32
    %c0_i32_0 = arith.constant 0 : i32
    %c0_i32_1 = arith.constant 0 : i32
    return %c0_i32, %c0_i32_0 : i32, i32
  }
  func.func @transform_4(%arg0: i32, %arg1: memref<16xi32, #tpu.memory_space<smem>>) -> (i32, i32) {
    %c0_i32 = arith.constant 0 : i32
    %c0_i32_0 = arith.constant 0 : i32
    %c0_i32_1 = arith.constant 0 : i32
    return %c0_i32, %c0_i32_0 : i32, i32
  }
  func.func @transform_5(%arg0: i32, %arg1: memref<16xi32, #tpu.memory_space<smem>>) -> (i32, i32) {
    %c0_i32 = arith.constant 0 : i32
    %c0_i32_0 = arith.constant 0 : i32
    %c0_i32_1 = arith.constant 0 : i32
    return %c0_i32, %c0_i32_0 : i32, i32
  }
  func.func @transform_6(%arg0: i32, %arg1: memref<16xi32, #tpu.memory_space<smem>>) -> (i32, i32) {
    %c0_i32 = arith.constant 0 : i32
    %c0_i32_0 = arith.constant 0 : i32
    %c0_i32_1 = arith.constant 0 : i32
    return %c0_i32, %c0_i32_0 : i32, i32
  }
}

</mosaic_0001>

<llo_original>
// kernel: tpu_custom_call.1
$region0: #{tpu_custom_call.1}
  #allocation0 [shape = 'u32[]', space=smem, size = 0x4, offset = 0x4, fixed_abs, tag = 'smem constant byte address 0x4 - core index']
  #allocation1 [shape = 'u32[72,128]{1,0:T(1,128)}', space=vmem, size = 0x9000, scoped, tag = 'internal scratch']
  #allocation2 [shape = 'f32[16,768]{1,0:T(8,128)}', space=vmem, size = 0xc000, scoped, tag = 'scratch operand']
  #allocation3 [shape = 's32[16]{0}', space=sflag, size = 0x40, scoped, tag = 'scratch operand']
  #allocation4 [shape = 's32[1]{0}', space=sflag, size = 0x4, scoped, tag = 'scoped memory for tpu_custom_call.1']
  #allocation5 [shape = 'u8[512]{0}', space=smem, size = 0x200, scoped, tag = 'prefetched SMEM operand 0']
  #allocation15 [shape = 's32[]', space=sflag, size = 0x4, offset = 0, fixed_abs, tag = 'sflag constant byte address 0x0 - dummy sync flag']
  #allocation16 [shape = 's32[]', space=sflag, size = 0x4, offset = 0, fixed_abs, tag = 'sflag constant byte address 0x0 - dummy sync flag']
  #allocation17 [shape = 's32[]', space=sflag, size = 0x4, offset = 0, fixed_abs, tag = 'sflag constant byte address 0x0 - dummy sync flag']
  #allocation18 [shape = 's32[]', space=sflag, size = 0x4, offset = 0, fixed_abs, tag = 'sflag constant byte address 0x0 - dummy sync flag']
  #allocation19 [shape = 's32[]', space=sflag, size = 0x4, offset = 0, fixed_abs, tag = 'sflag constant byte address 0x0 - dummy sync flag']
  #allocation20 [shape = 's32[]', space=sflag, size = 0x4, offset = 0, fixed_abs, tag = 'sflag constant byte address 0x0 - dummy sync flag']
  #allocation21 [shape = 's32[]', space=sflag, size = 0x4, offset = 0, fixed_abs, tag = 'sflag constant byte address 0x0 - dummy sync flag']
  #allocation22 [shape = 's32[]', space=sflag, size = 0x4, offset = 0, fixed_abs, tag = 'sflag constant byte address 0x0 - dummy sync flag']
  #allocation23 [shape = 's32[]', space=sflag, size = 0x4, offset = 0, fixed_abs, tag = 'sflag constant byte address 0x0 - dummy sync flag']
  #allocation24 [shape = 's32[]', space=sflag, size = 0x4, offset = 0, fixed_abs, tag = 'sflag constant byte address 0x0 - dummy sync flag']
  #allocation25 [shape = 's32[]', space=sflag, size = 0x4, offset = 0, fixed_abs, tag = 'sflag constant byte address 0x0 - dummy sync flag']
  #allocation26 [shape = 's32[]', space=sflag, size = 0x4, offset = 0, fixed_abs, tag = 'sflag constant byte address 0x0 - dummy sync flag']
  #allocation27 [shape = 's32[]', space=sflag, size = 0x4, offset = 0, fixed_abs, tag = 'sflag constant byte address 0x0 - dummy sync flag']
  #allocation28 [shape = 's32[]', space=sflag, size = 0x4, offset = 0, fixed_abs, tag = 'sflag constant byte address 0x0 - dummy sync flag']
  #allocation29 [shape = 's32[]', space=sflag, size = 0x4, offset = 0, fixed_abs, tag = 'sflag constant byte address 0x0 - dummy sync flag']
  #allocation30 [shape = 's32[]', space=sflag, size = 0x4, offset = 0, fixed_abs, tag = 'sflag constant byte address 0x0 - dummy sync flag']
  %s0 = inlined_call_operand.hbm [shape: s32[16], index: 0, kind: input, shape index: {}]
  %s1 = inlined_call_operand.hbm [shape: f32[256,768], index: 1, kind: input, shape index: {}]
  %s2 = inlined_call_operand.hbm [shape: f32[1,768], index: 2, kind: input, shape index: {}]
  %s3 = inlined_call_operand.hbm [shape: bf16[768,128], index: 3, kind: input, shape index: {}]
  %s4 = inlined_call_operand.vmem [shape: f32[1,128], index: 4, kind: input, shape index: {}]
  %s5 = inlined_call_operand.hbm [shape: f32[16,768], index: 5, kind: output, shape index: {0}]
  %s6 = inlined_call_operand.hbm [shape: f32[16,128], index: 6, kind: output, shape index: {1}]
  %s7 = inlined_call_operand.hbm [shape: s32[16,128], index: 7, kind: output, shape index: {2}]
  %8 = xla_tuple %s5, %s6, %s7
  %s9 = sld [smem:[#allocation0]]
  $region46: #{tpu_custom_call.1} parent=0
    _
  %s11 = ssub.s32 1, %s9
  %s12 = scalar_select 0, %s11, %s9
  %s14 = sshll.u32 %s0, 4
  %s15 = int_to_ptr.hbm [resolvable:$true] %s14
  %17 = dma.hbm_to_smem %s15, 16, [#allocation5], [#allocation4]
  %19 = dma.done [#allocation4], 16
  %20 = sfence
  $region1: #{tpu_custom_call.1} parent=0
    #allocation6 [shape = 'u8[3072]{0}', space=vmem, size = 0xc00, scoped, tag = 'input window, operand 2, single buffered']
    #allocation7 [shape = 's32[1]{0}', space=sflag, size = 0x4, scoped, tag = 'scoped memory for tpu_custom_call.1']
    #allocation8 [shape = 's32[1]{0}', space=sflag, size = 0x4, scoped, tag = 'scoped memory for tpu_custom_call.1']
    #allocation9 [shape = 'u8[196608]{0}', space=vmem, size = 0x30000, scoped, tag = 'input window, operand 3, single buffered']
    #allocation10 [shape = 's32[1]{0}', space=sflag, size = 0x4, scoped, tag = 'scoped memory for tpu_custom_call.1']
    #allocation11 [shape = 'u8[49152]{0}', space=vmem, size = 0xc000, scoped, tag = 'output window, operand 0, single buffered']
    #allocation12 [shape = 'u8[8192]{0}', space=vmem, size = 0x2000, scoped, tag = 'output window, operand 1, single buffered']
    #allocation13 [shape = 's32[1]{0}', space=sflag, size = 0x4, scoped, tag = 'scoped memory for tpu_custom_call.1']
    #allocation14 [shape = 'u8[8192]{0}', space=vmem, size = 0x2000, scoped, tag = 'output window, operand 2, single buffered']
    %21 = vsyncpa [#allocation7], 0
    %22 = vsyncpa [#allocation10], 0
    %23 = vsyncpa [#allocation8], 0
    %24 = vsyncpa [#allocation13], 0
    // Predicated region
    $region2: #{tpu_custom_call.1} parent=1 // pred_check
      _
    $region3: #{tpu_custom_call.1} parent=1 // pred_check_branch
      %26 = sbr.rel (0) target = $region5
    $region4: #{tpu_custom_call.1} parent=1 // pred_region
      %28 = vsyncadd [#allocation7], 0
      %s30 = sshll.u32 %s2, 4
      %s31 = int_to_ptr.hbm [resolvable:$true] %s30
      %s32 = sshll.u32 [#allocation6], 4
      %s33 = int_to_ptr.vmem [resolvable:$true] %s32
      %35 = dma.hbm_to_vmem [thread:$0]  %s31, 96, %s33, [#allocation7]
    $region5: #{tpu_custom_call.1} parent=1 // pred_fallthru
      _
    // Predicated region
    $region6: #{tpu_custom_call.1} parent=1 // pred_check
      _
    $region7: #{tpu_custom_call.1} parent=1 // pred_check_branch
      %37 = sbr.rel (0) target = $region9
    $region8: #{tpu_custom_call.1} parent=1 // pred_region
      %39 = vsyncadd [#allocation10], 0
      %s40 = sshll.u32 %s3, 4
      %s41 = int_to_ptr.hbm [resolvable:$true] %s40
      %s42 = sshll.u32 [#allocation9], 4
      %s43 = int_to_ptr.vmem [resolvable:$true] %s42
      %48 = dma.hbm_to_vmem [thread:$0]  %s41, 6144, %s43, [#allocation10], 64, 64, 4
    $region9: #{tpu_custom_call.1} parent=1 // pred_fallthru
      _
    // Predicated region
    $region10: #{tpu_custom_call.1} parent=1 // pred_check
      _
    $region11: #{tpu_custom_call.1} parent=1 // pred_check_branch
      %50 = sbr.rel (0) target = $region13
    $region12: #{tpu_custom_call.1} parent=1 // pred_region
      _
    $region13: #{tpu_custom_call.1} parent=1 // pred_fallthru
      _
    // Predicated region
    $region14: #{tpu_custom_call.1} parent=1 // pred_check
      _
    $region15: #{tpu_custom_call.1} parent=1 // pred_check_branch
      %52 = sbr.rel (0) target = $region17
    $region16: #{tpu_custom_call.1} parent=1 // pred_region
      %54 = dma.done [#allocation7], 96
    $region17: #{tpu_custom_call.1} parent=1 // pred_fallthru
      _
    // Predicated region
    $region18: #{tpu_custom_call.1} parent=1 // pred_check
      _
    $region19: #{tpu_custom_call.1} parent=1 // pred_check_branch
      %56 = sbr.rel (0) target = $region21
    $region20: #{tpu_custom_call.1} parent=1 // pred_region
      %58 = dma.done [#allocation10], 6144
    $region21: #{tpu_custom_call.1} parent=1 // pred_fallthru
      _
    %s59 = sld [smem:[#allocation5]]
    %s60 = sshrl.u32 %s59, 3
    %s61 = sand.u32 %s59, 7
    %s62 = smul.u32 %s60, 48
    %s63 = sadd.s32 %s61, %s62
    %s64 = scalar_lea.hbm %s1, %s63
    %s65 = sshll.u32 %s64, 4
    %s66 = int_to_ptr.hbm [resolvable:$true] %s65
    %s67 = sshll.u32 [#allocation2], 4
    %s68 = int_to_ptr.vmem [resolvable:$true] %s67
    %72 = dma.hbm_to_vmem [thread:$0]  %s66, 96, %s68, [#allocation3], 128, 128, 1
    %s73 = sld [smem:[#allocation5 + $0x1]]
    %s74 = sshrl.u32 %s73, 3
    %s75 = sand.u32 %s73, 7
    %s76 = smul.u32 %s74, 48
    %s77 = sadd.s32 %s75, %s76
    %s78 = scalar_lea.hbm %s1, %s77
    %s79 = scalar_lea.vmem [#allocation2], 1
    %s80 = scalar_lea.sflag [#allocation3], 1
    %s81 = sshll.u32 %s78, 4
    %s82 = int_to_ptr.hbm [resolvable:$true] %s81
    %s83 = sshll.u32 %s79, 4
    %s84 = int_to_ptr.vmem [resolvable:$true] %s83
    %88 = dma.hbm_to_vmem [thread:$0]  %s82, 96, %s84, %s80, 128, 128, 1
    %s89 = sld [smem:[#allocation5 + $0x2]]
    %s90 = sshrl.u32 %s89, 3
    %s91 = sand.u32 %s89, 7
    %s92 = smul.u32 %s90, 48
    %s93 = sadd.s32 %s91, %s92
    %s94 = scalar_lea.hbm %s1, %s93
    %s95 = scalar_lea.vmem [#allocation2], 2
    %s96 = scalar_lea.sflag [#allocation3], 2
    %s97 = sshll.u32 %s94, 4
    %s98 = int_to_ptr.hbm [resolvable:$true] %s97
    %s99 = sshll.u32 %s95, 4
    %s100 = int_to_ptr.vmem [resolvable:$true] %s99
    %104 = dma.hbm_to_vmem [thread:$0]  %s98, 96, %s100, %s96, 128, 128, 1
    %s105 = sld [smem:[#allocation5 + $0x3]]
    %s106 = sshrl.u32 %s105, 3
    %s107 = sand.u32 %s105, 7
    %s108 = smul.u32 %s106, 48
    %s109 = sadd.s32 %s107, %s108
    %s110 = scalar_lea.hbm %s1, %s109
    %s111 = scalar_lea.vmem [#allocation2], 3
    %s112 = scalar_lea.sflag [#allocation3], 3
    %s113 = sshll.u32 %s110, 4
    %s114 = int_to_ptr.hbm [resolvable:$true] %s113
    %s115 = sshll.u32 %s111, 4
    %s116 = int_to_ptr.vmem [resolvable:$true] %s115
    %120 = dma.hbm_to_vmem [thread:$0]  %s114, 96, %s116, %s112, 128, 128, 1
    %s121 = sld [smem:[#allocation5 + $0x4]]
    %s122 = sshrl.u32 %s121, 3
    %s123 = sand.u32 %s121, 7
    %s124 = smul.u32 %s122, 48
    %s125 = sadd.s32 %s123, %s124
    %s126 = scalar_lea.hbm %s1, %s125
    %s127 = scalar_lea.vmem [#allocation2], 4
    %s128 = scalar_lea.sflag [#allocation3], 4
    %s129 = sshll.u32 %s126, 4
    %s130 = int_to_ptr.hbm [resolvable:$true] %s129
    %s131 = sshll.u32 %s127, 4
    %s132 = int_to_ptr.vmem [resolvable:$true] %s131
    %136 = dma.hbm_to_vmem [thread:$0]  %s130, 96, %s132, %s128, 128, 128, 1
    %s137 = sld [smem:[#allocation5 + $0x5]]
    %s138 = sshrl.u32 %s137, 3
    %s139 = sand.u32 %s137, 7
    %s140 = smul.u32 %s138, 48
    %s141 = sadd.s32 %s139, %s140
    %s142 = scalar_lea.hbm %s1, %s141
    %s143 = scalar_lea.vmem [#allocation2], 5
    %s144 = scalar_lea.sflag [#allocation3], 5
    %s145 = sshll.u32 %s142, 4
    %s146 = int_to_ptr.hbm [resolvable:$true] %s145
    %s147 = sshll.u32 %s143, 4
    %s148 = int_to_ptr.vmem [resolvable:$true] %s147
    %152 = dma.hbm_to_vmem [thread:$0]  %s146, 96, %s148, %s144, 128, 128, 1
    %s153 = sld [smem:[#allocation5 + $0x6]]
    %s154 = sshrl.u32 %s153, 3
    %s155 = sand.u32 %s153, 7
    %s156 = smul.u32 %s154, 48
    %s157 = sadd.s32 %s155, %s156
    %s158 = scalar_lea.hbm %s1, %s157
    %s159 = scalar_lea.vmem [#allocation2], 6
    %s160 = scalar_lea.sflag [#allocation3], 6
    %s161 = sshll.u32 %s158, 4
    %s162 = int_to_ptr.hbm [resolvable:$true] %s161
    %s163 = sshll.u32 %s159, 4
    %s164 = int_to_ptr.vmem [resolvable:$true] %s163
    %168 = dma.hbm_to_vmem [thread:$0]  %s162, 96, %s164, %s160, 128, 128, 1
    %s169 = sld [smem:[#allocation5 + $0x7]]
    %s170 = sshrl.u32 %s169, 3
    %s171 = sand.u32 %s169, 7
    %s172 = smul.u32 %s170, 48
    %s173 = sadd.s32 %s171, %s172
    %s174 = scalar_lea.hbm %s1, %s173
    %s175 = scalar_lea.vmem [#allocation2], 7
    %s176 = scalar_lea.sflag [#allocation3], 7
    %s177 = sshll.u32 %s174, 4
    %s178 = int_to_ptr.hbm [resolvable:$true] %s177
    %s179 = sshll.u32 %s175, 4
    %s180 = int_to_ptr.vmem [resolvable:$true] %s179
    %184 = dma.hbm_to_vmem [thread:$0]  %s178, 96, %s180, %s176, 128, 128, 1
    %s185 = sld [smem:[#allocation5 + $0x8]]
    %s186 = sshrl.u32 %s185, 3
    %s187 = sand.u32 %s185, 7
    %s188 = smul.u32 %s186, 48
    %s189 = sadd.s32 %s187, %s188
    %s190 = scalar_lea.hbm %s1, %s189
    %s191 = scalar_lea.vmem [#allocation2], 48
    %s192 = scalar_lea.sflag [#allocation3], 8
    %s193 = sshll.u32 %s190, 4
    %s194 = int_to_ptr.hbm [resolvable:$true] %s193
    %s195 = sshll.u32 %s191, 4
    %s196 = int_to_ptr.vmem [resolvable:$true] %s195
    %200 = dma.hbm_to_vmem [thread:$0]  %s194, 96, %s196, %s192, 128, 128, 1
    %s201 = sld [smem:[#allocation5 + $0x9]]
    %s202 = sshrl.u32 %s201, 3
    %s203 = sand.u32 %s201, 7
    %s204 = smul.u32 %s202, 48
    %s205 = sadd.s32 %s203, %s204
    %s206 = scalar_lea.hbm %s1, %s205
    %s207 = scalar_lea.vmem [#allocation2], 49
    %s208 = scalar_lea.sflag [#allocation3], 9
    %s209 = sshll.u32 %s206, 4
    %s210 = int_to_ptr.hbm [resolvable:$true] %s209
    %s211 = sshll.u32 %s207, 4
    %s212 = int_to_ptr.vmem [resolvable:$true] %s211
    %216 = dma.hbm_to_vmem [thread:$0]  %s210, 96, %s212, %s208, 128, 128, 1
    %s217 = sld [smem:[#allocation5 + $0xa]]
    %s218 = sshrl.u32 %s217, 3
    %s219 = sand.u32 %s217, 7
    %s220 = smul.u32 %s218, 48
    %s221 = sadd.s32 %s219, %s220
    %s222 = scalar_lea.hbm %s1, %s221
    %s223 = scalar_lea.vmem [#allocation2], 50
    %s224 = scalar_lea.sflag [#allocation3], 10
    %s225 = sshll.u32 %s222, 4
    %s226 = int_to_ptr.hbm [resolvable:$true] %s225
    %s227 = sshll.u32 %s223, 4
    %s228 = int_to_ptr.vmem [resolvable:$true] %s227
    %232 = dma.hbm_to_vmem [thread:$0]  %s226, 96, %s228, %s224, 128, 128, 1
    %s233 = sld [smem:[#allocation5 + $0xb]]
    %s234 = sshrl.u32 %s233, 3
    %s235 = sand.u32 %s233, 7
    %s236 = smul.u32 %s234, 48
    %s237 = sadd.s32 %s235, %s236
    %s238 = scalar_lea.hbm %s1, %s237
    %s239 = scalar_lea.vmem [#allocation2], 51
    %s240 = scalar_lea.sflag [#allocation3], 11
    %s241 = sshll.u32 %s238, 4
    %s242 = int_to_ptr.hbm [resolvable:$true] %s241
    %s243 = sshll.u32 %s239, 4
    %s244 = int_to_ptr.vmem [resolvable:$true] %s243
    %248 = dma.hbm_to_vmem [thread:$0]  %s242, 96, %s244, %s240, 128, 128, 1
    %s249 = sld [smem:[#allocation5 + $0xc]]
    %s250 = sshrl.u32 %s249, 3
    %s251 = sand.u32 %s249, 7
    %s252 = smul.u32 %s250, 48
    %s253 = sadd.s32 %s251, %s252
    %s254 = scalar_lea.hbm %s1, %s253
    %s255 = scalar_lea.vmem [#allocation2], 52
    %s256 = scalar_lea.sflag [#allocation3], 12
    %s257 = sshll.u32 %s254, 4
    %s258 = int_to_ptr.hbm [resolvable:$true] %s257
    %s259 = sshll.u32 %s255, 4
    %s260 = int_to_ptr.vmem [resolvable:$true] %s259
    %264 = dma.hbm_to_vmem [thread:$0]  %s258, 96, %s260, %s256, 128, 128, 1
    %s265 = sld [smem:[#allocation5 + $0xd]]
    %s266 = sshrl.u32 %s265, 3
    %s267 = sand.u32 %s265, 7
    %s268 = smul.u32 %s266, 48
    %s269 = sadd.s32 %s267, %s268
    %s270 = scalar_lea.hbm %s1, %s269
    %s271 = scalar_lea.vmem [#allocation2], 53
    %s272 = scalar_lea.sflag [#allocation3], 13
    %s273 = sshll.u32 %s270, 4
    %s274 = int_to_ptr.hbm [resolvable:$true] %s273
    %s275 = sshll.u32 %s271, 4
    %s276 = int_to_ptr.vmem [resolvable:$true] %s275
    %280 = dma.hbm_to_vmem [thread:$0]  %s274, 96, %s276, %s272, 128, 128, 1
    %s281 = sld [smem:[#allocation5 + $0xe]]
    %s282 = sshrl.u32 %s281, 3
    %s283 = sand.u32 %s281, 7
    %s284 = smul.u32 %s282, 48
    %s285 = sadd.s32 %s283, %s284
    %s286 = scalar_lea.hbm %s1, %s285
    %s287 = scalar_lea.vmem [#allocation2], 54
    %s288 = scalar_lea.sflag [#allocation3], 14
    %s289 = sshll.u32 %s286, 4
    %s290 = int_to_ptr.hbm [resolvable:$true] %s289
    %s291 = sshll.u32 %s287, 4
    %s292 = int_to_ptr.vmem [resolvable:$true] %s291
    %296 = dma.hbm_to_vmem [thread:$0]  %s290, 96, %s292, %s288, 128, 128, 1
    %s297 = sld [smem:[#allocation5 + $0xf]]
    %s298 = sshrl.u32 %s297, 3
    %s299 = sand.u32 %s297, 7
    %s300 = smul.u32 %s298, 48
    %s301 = sadd.s32 %s299, %s300
    %s302 = scalar_lea.hbm %s1, %s301
    %s303 = scalar_lea.vmem [#allocation2], 55
    %s304 = scalar_lea.sflag [#allocation3], 15
    %s305 = sshll.u32 %s302, 4
    %s306 = int_to_ptr.hbm [resolvable:$true] %s305
    %s307 = sshll.u32 %s303, 4
    %s308 = int_to_ptr.vmem [resolvable:$true] %s307
    %312 = dma.hbm_to_vmem [thread:$0]  %s306, 96, %s308, %s304, 128, 128, 1
    %s313 = sld [smem:[#allocation5]]
    %s314 = smul.u32 1, 6
    %s315 = sshll.u32 %s314, 4
    %316 = dma.done [#allocation3], %s315
    %s317 = sld [smem:[#allocation5 + $0x1]]
    %s318 = sshll.u32 %s314, 4
    %319 = dma.done %s80, %s318
    %s320 = sld [smem:[#allocation5 + $0x2]]
    %s321 = sshll.u32 %s314, 4
    %322 = dma.done %s96, %s321
    %s323 = sld [smem:[#allocation5 + $0x3]]
    %s324 = sshll.u32 %s314, 4
    %325 = dma.done %s112, %s324
    %s326 = sld [smem:[#allocation5 + $0x4]]
    %s327 = sshll.u32 %s314, 4
    %328 = dma.done %s128, %s327
    %s329 = sld [smem:[#allocation5 + $0x5]]
    %s330 = sshll.u32 %s314, 4
    %331 = dma.done %s144, %s330
    %s332 = sld [smem:[#allocation5 + $0x6]]
    %s333 = sshll.u32 %s314, 4
    %334 = dma.done %s160, %s333
    %s335 = sld [smem:[#allocation5 + $0x7]]
    %s336 = sshll.u32 %s314, 4
    %337 = dma.done %s176, %s336
    %s338 = sld [smem:[#allocation5 + $0x8]]
    %s339 = sshll.u32 %s314, 4
    %340 = dma.done %s192, %s339
    %s341 = sld [smem:[#allocation5 + $0x9]]
    %s342 = sshll.u32 %s314, 4
    %343 = dma.done %s208, %s342
    %s344 = sld [smem:[#allocation5 + $0xa]]
    %s345 = sshll.u32 %s314, 4
    %346 = dma.done %s224, %s345
    %s347 = sld [smem:[#allocation5 + $0xb]]
    %s348 = sshll.u32 %s314, 4
    %349 = dma.done %s240, %s348
    %s350 = sld [smem:[#allocation5 + $0xc]]
    %s351 = sshll.u32 %s314, 4
    %352 = dma.done %s256, %s351
    %s353 = sld [smem:[#allocation5 + $0xd]]
    %s354 = sshll.u32 %s314, 4
    %355 = dma.done %s272, %s354
    %s356 = sld [smem:[#allocation5 + $0xe]]
    %s357 = sshll.u32 %s314, 4
    %358 = dma.done %s288, %s357
    %s359 = sld [smem:[#allocation5 + $0xf]]
    %s360 = sshll.u32 %s314, 4
    %361 = dma.done %s304, %s360
    %v362 = vld [vmem:[#allocation2] sm:$0xff]
    %v363 = vld [vmem:[#allocation2 + $0x8] sm:$0xff]
    %v364 = vld [vmem:[#allocation2 + $0x10] sm:$0xff]
    %v365 = vld [vmem:[#allocation2 + $0x18] sm:$0xff]
    %v366 = vld [vmem:[#allocation2 + $0x20] sm:$0xff]
    %v367 = vld [vmem:[#allocation2 + $0x28] sm:$0xff]
    %v368 = vld [vmem:[#allocation2 + $0x30] sm:$0xff]
    %v369 = vld [vmem:[#allocation2 + $0x38] sm:$0xff]
    %v370 = vld [vmem:[#allocation2 + $0x40] sm:$0xff]
    %v371 = vld [vmem:[#allocation2 + $0x48] sm:$0xff]
    %v372 = vld [vmem:[#allocation2 + $0x50] sm:$0xff]
    %v373 = vld [vmem:[#allocation2 + $0x58] sm:$0xff]
    %v374 = vld [vmem:[#allocation6] sm:$0x3f]
    %v376 = vperm.slane %v374, 0
    %v377 = vperm.slane %v374, 1
    %v378 = vperm.slane %v374, 2
    %v379 = vperm.slane %v374, 3
    %v380 = vperm.slane %v374, 4
    %v381 = vperm.slane %v374, 5
    %v388 = vmul.f32 %v362, %v376
    %v389 = vmul.f32 %v363, %v377
    %v390 = vmul.f32 %v364, %v378
    %v391 = vmul.f32 %v365, %v379
    %v392 = vmul.f32 %v366, %v380
    %v393 = vmul.f32 %v367, %v381
    %v394 = vmul.f32 %v368, %v376
    %v395 = vmul.f32 %v369, %v377
    %v396 = vmul.f32 %v370, %v378
    %v397 = vmul.f32 %v371, %v379
    %v398 = vmul.f32 %v372, %v380
    %v399 = vmul.f32 %v373, %v381
    %400 = vst [vmem:[#allocation11] sm:$0xff] %v388
    %401 = vst [vmem:[#allocation11 + $0x8] sm:$0xff] %v389
    %402 = vst [vmem:[#allocation11 + $0x10] sm:$0xff] %v390
    %403 = vst [vmem:[#allocation11 + $0x18] sm:$0xff] %v391
    %404 = vst [vmem:[#allocation11 + $0x20] sm:$0xff] %v392
    %405 = vst [vmem:[#allocation11 + $0x28] sm:$0xff] %v393
    %406 = vst [vmem:[#allocation11 + $0x30] sm:$0xff] %v394
    %407 = vst [vmem:[#allocation11 + $0x38] sm:$0xff] %v395
    %408 = vst [vmem:[#allocation11 + $0x40] sm:$0xff] %v396
    %409 = vst [vmem:[#allocation11 + $0x48] sm:$0xff] %v397
    %410 = vst [vmem:[#allocation11 + $0x50] sm:$0xff] %v398
    %411 = vst [vmem:[#allocation11 + $0x58] sm:$0xff] %v399
    %v412 = vpack.c.bf16 %v394, %v388
    %v413 = vpack.c.bf16 %v395, %v389
    %v414 = vpack.c.bf16 %v396, %v390
    %v415 = vpack.c.bf16 %v397, %v391
    %v416 = vpack.c.bf16 %v398, %v392
    %v417 = vpack.c.bf16 %v399, %v393
    %v418 = vld [vmem:[#allocation9] sm:$0xf]
    %v419 = vld [vmem:[#allocation9 + $0x4] sm:$0xf]
    %v420 = vld [vmem:[#allocation9 + $0x8] sm:$0xf]
    %v421 = vld [vmem:[#allocation9 + $0xc] sm:$0xf]
    %v422 = vld [vmem:[#allocation9 + $0x10] sm:$0xf]
    %v423 = vld [vmem:[#allocation9 + $0x14] sm:$0xf]
    %v424 = vld [vmem:[#allocation9 + $0x18] sm:$0xf]
    %v425 = vld [vmem:[#allocation9 + $0x1c] sm:$0xf]
    %v426 = vld [vmem:[#allocation9 + $0x20] sm:$0xf]
    %v427 = vld [vmem:[#allocation9 + $0x24] sm:$0xf]
    %v428 = vld [vmem:[#allocation9 + $0x28] sm:$0xf]
    %v429 = vld [vmem:[#allocation9 + $0x2c] sm:$0xf]
    %v430 = vld [vmem:[#allocation9 + $0x30] sm:$0xf]
    %v431 = vld [vmem:[#allocation9 + $0x34] sm:$0xf]
    %v432 = vld [vmem:[#allocation9 + $0x38] sm:$0xf]
    %v433 = vld [vmem:[#allocation9 + $0x3c] sm:$0xf]
    %v434 = vld [vmem:[#allocation9 + $0x40] sm:$0xf]
    %v435 = vld [vmem:[#allocation9 + $0x44] sm:$0xf]
    %v436 = vld [vmem:[#allocation9 + $0x48] sm:$0xf]
    %v437 = vld [vmem:[#allocation9 + $0x4c] sm:$0xf]
    %v438 = vld [vmem:[#allocation9 + $0x50] sm:$0xf]
    %v439 = vld [vmem:[#allocation9 + $0x54] sm:$0xf]
    %v440 = vld [vmem:[#allocation9 + $0x58] sm:$0xf]
    %v441 = vld [vmem:[#allocation9 + $0x5c] sm:$0xf]
    %v442 = vld [vmem:[#allocation9 + $0x60] sm:$0xf]
    %v443 = vld [vmem:[#allocation9 + $0x64] sm:$0xf]
    %v444 = vld [vmem:[#allocation9 + $0x68] sm:$0xf]
    %v445 = vld [vmem:[#allocation9 + $0x6c] sm:$0xf]
    %v446 = vld [vmem:[#allocation9 + $0x70] sm:$0xf]
    %v447 = vld [vmem:[#allocation9 + $0x74] sm:$0xf]
    %v448 = vld [vmem:[#allocation9 + $0x78] sm:$0xf]
    %v449 = vld [vmem:[#allocation9 + $0x7c] sm:$0xf]
    %v450 = vld [vmem:[#allocation9 + $0x80] sm:$0xf]
    %v451 = vld [vmem:[#allocation9 + $0x84] sm:$0xf]
    %v452 = vld [vmem:[#allocation9 + $0x88] sm:$0xf]
    %v453 = vld [vmem:[#allocation9 + $0x8c] sm:$0xf]
    %v454 = vld [vmem:[#allocation9 + $0x90] sm:$0xf]
    %v455 = vld [vmem:[#allocation9 + $0x94] sm:$0xf]
    %v456 = vld [vmem:[#allocation9 + $0x98] sm:$0xf]
    %v457 = vld [vmem:[#allocation9 + $0x9c] sm:$0xf]
    %v458 = vld [vmem:[#allocation9 + $0xa0] sm:$0xf]
    %v459 = vld [vmem:[#allocation9 + $0xa4] sm:$0xf]
    %v460 = vld [vmem:[#allocation9 + $0xa8] sm:$0xf]
    %v461 = vld [vmem:[#allocation9 + $0xac] sm:$0xf]
    %v462 = vld [vmem:[#allocation9 + $0xb0] sm:$0xf]
    %v463 = vld [vmem:[#allocation9 + $0xb4] sm:$0xf]
    %v464 = vld [vmem:[#allocation9 + $0xb8] sm:$0xf]
    %v465 = vld [vmem:[#allocation9 + $0xbc] sm:$0xf]
    %v466 = vld [vmem:[#allocation9 + $0xc0] sm:$0xf]
    %v467 = vld [vmem:[#allocation9 + $0xc4] sm:$0xf]
    %v468 = vld [vmem:[#allocation9 + $0xc8] sm:$0xf]
    %v469 = vld [vmem:[#allocation9 + $0xcc] sm:$0xf]
    %v470 = vld [vmem:[#allocation9 + $0xd0] sm:$0xf]
    %v471 = vld [vmem:[#allocation9 + $0xd4] sm:$0xf]
    %v472 = vld [vmem:[#allocation9 + $0xd8] sm:$0xf]
    %v473 = vld [vmem:[#allocation9 + $0xdc] sm:$0xf]
    %v474 = vld [vmem:[#allocation9 + $0xe0] sm:$0xf]
    %v475 = vld [vmem:[#allocation9 + $0xe4] sm:$0xf]
    %v476 = vld [vmem:[#allocation9 + $0xe8] sm:$0xf]
    %v477 = vld [vmem:[#allocation9 + $0xec] sm:$0xf]
    %v478 = vld [vmem:[#allocation9 + $0xf0] sm:$0xf]
    %v479 = vld [vmem:[#allocation9 + $0xf4] sm:$0xf]
    %v480 = vld [vmem:[#allocation9 + $0xf8] sm:$0xf]
    %v481 = vld [vmem:[#allocation9 + $0xfc] sm:$0xf]
    %v482 = vld [vmem:[#allocation9 + $0x100] sm:$0xf]
    %v483 = vld [vmem:[#allocation9 + $0x104] sm:$0xf]
    %v484 = vld [vmem:[#allocation9 + $0x108] sm:$0xf]
    %v485 = vld [vmem:[#allocation9 + $0x10c] sm:$0xf]
    %v486 = vld [vmem:[#allocation9 + $0x110] sm:$0xf]
    %v487 = vld [vmem:[#allocation9 + $0x114] sm:$0xf]
    %v488 = vld [vmem:[#allocation9 + $0x118] sm:$0xf]
    %v489 = vld [vmem:[#allocation9 + $0x11c] sm:$0xf]
    %v490 = vld [vmem:[#allocation9 + $0x120] sm:$0xf]
    %v491 = vld [vmem:[#allocation9 + $0x124] sm:$0xf]
    %v492 = vld [vmem:[#allocation9 + $0x128] sm:$0xf]
    %v493 = vld [vmem:[#allocation9 + $0x12c] sm:$0xf]
    %v494 = vld [vmem:[#allocation9 + $0x130] sm:$0xf]
    %v495 = vld [vmem:[#allocation9 + $0x134] sm:$0xf]
    %v496 = vld [vmem:[#allocation9 + $0x138] sm:$0xf]
    %v497 = vld [vmem:[#allocation9 + $0x13c] sm:$0xf]
    %v498 = vld [vmem:[#allocation9 + $0x140] sm:$0xf]
    %v499 = vld [vmem:[#allocation9 + $0x144] sm:$0xf]
    %v500 = vld [vmem:[#allocation9 + $0x148] sm:$0xf]
    %v501 = vld [vmem:[#allocation9 + $0x14c] sm:$0xf]
    %v502 = vld [vmem:[#allocation9 + $0x150] sm:$0xf]
    %v503 = vld [vmem:[#allocation9 + $0x154] sm:$0xf]
    %v504 = vld [vmem:[#allocation9 + $0x158] sm:$0xf]
    %v505 = vld [vmem:[#allocation9 + $0x15c] sm:$0xf]
    %v506 = vld [vmem:[#allocation9 + $0x160] sm:$0xf]
    %v507 = vld [vmem:[#allocation9 + $0x164] sm:$0xf]
    %v508 = vld [vmem:[#allocation9 + $0x168] sm:$0xf]
    %v509 = vld [vmem:[#allocation9 + $0x16c] sm:$0xf]
    %v510 = vld [vmem:[#allocation9 + $0x170] sm:$0xf]
    %v511 = vld [vmem:[#allocation9 + $0x174] sm:$0xf]
    %v512 = vld [vmem:[#allocation9 + $0x178] sm:$0xf]
    %v513 = vld [vmem:[#allocation9 + $0x17c] sm:$0xf]
    %v514 = vld [vmem:[%s4] sm:$0x1]
    %v516 = vperm.slane %v514, 0
    %v614 = vunpack.c.l.b16 %v418
    %v615 = vunpack.c.l.b16 %v419
    %v616 = vunpack.c.l.b16 %v420
    %v617 = vunpack.c.l.b16 %v421
    %v618 = vunpack.c.l.b16 %v422
    %v619 = vunpack.c.l.b16 %v423
    %v620 = vunpack.c.l.b16 %v424
    %v621 = vunpack.c.l.b16 %v425
    %v622 = vunpack.c.l.b16 %v426
    %v623 = vunpack.c.l.b16 %v427
    %v624 = vunpack.c.l.b16 %v428
    %v625 = vunpack.c.l.b16 %v429
    %v626 = vunpack.c.l.b16 %v430
    %v627 = vunpack.c.l.b16 %v431
    %v628 = vunpack.c.l.b16 %v432
    %v629 = vunpack.c.l.b16 %v433
    %v630 = vunpack.c.l.b16 %v434
    %v631 = vunpack.c.l.b16 %v435
    %v632 = vunpack.c.l.b16 %v436
    %v633 = vunpack.c.l.b16 %v437
    %v634 = vunpack.c.l.b16 %v438
    %v635 = vunpack.c.l.b16 %v439
    %v636 = vunpack.c.l.b16 %v440
    %v637 = vunpack.c.l.b16 %v441
    %v638 = vunpack.c.l.b16 %v442
    %v639 = vunpack.c.l.b16 %v443
    %v640 = vunpack.c.l.b16 %v444
    %v641 = vunpack.c.l.b16 %v445
    %v642 = vunpack.c.l.b16 %v446
    %v643 = vunpack.c.l.b16 %v447
    %v644 = vunpack.c.l.b16 %v448
    %v645 = vunpack.c.l.b16 %v449
    %v646 = vunpack.c.l.b16 %v450
    %v647 = vunpack.c.l.b16 %v451
    %v648 = vunpack.c.l.b16 %v452
    %v649 = vunpack.c.l.b16 %v453
    %v650 = vunpack.c.l.b16 %v454
    %v651 = vunpack.c.l.b16 %v455
    %v652 = vunpack.c.l.b16 %v456
    %v653 = vunpack.c.l.b16 %v457
    %v654 = vunpack.c.l.b16 %v458
    %v655 = vunpack.c.l.b16 %v459
    %v656 = vunpack.c.l.b16 %v460
    %v657 = vunpack.c.l.b16 %v461
    %v658 = vunpack.c.l.b16 %v462
    %v659 = vunpack.c.l.b16 %v463
    %v660 = vunpack.c.l.b16 %v464
    %v661 = vunpack.c.l.b16 %v465
    %v662 = vunpack.c.l.b16 %v466
    %v663 = vunpack.c.l.b16 %v467
    %v664 = vunpack.c.l.b16 %v468
    %v665 = vunpack.c.l.b16 %v469
    %v666 = vunpack.c.l.b16 %v470
    %v667 = vunpack.c.l.b16 %v471
    %v668 = vunpack.c.l.b16 %v472
    %v669 = vunpack.c.l.b16 %v473
    %v670 = vunpack.c.l.b16 %v474
    %v671 = vunpack.c.l.b16 %v475
    %v672 = vunpack.c.l.b16 %v476
    %v673 = vunpack.c.l.b16 %v477
    %v674 = vunpack.c.l.b16 %v478
    %v675 = vunpack.c.l.b16 %v479
    %v676 = vunpack.c.l.b16 %v480
    %v677 = vunpack.c.l.b16 %v481
    %v678 = vunpack.c.l.b16 %v482
    %v679 = vunpack.c.l.b16 %v483
    %v680 = vunpack.c.l.b16 %v484
    %v681 = vunpack.c.l.b16 %v485
    %v682 = vunpack.c.l.b16 %v486
    %v683 = vunpack.c.l.b16 %v487
    %v684 = vunpack.c.l.b16 %v488
    %v685 = vunpack.c.l.b16 %v489
    %v686 = vunpack.c.l.b16 %v490
    %v687 = vunpack.c.l.b16 %v491
    %v688 = vunpack.c.l.b16 %v492
    %v689 = vunpack.c.l.b16 %v493
    %v690 = vunpack.c.l.b16 %v494
    %v691 = vunpack.c.l.b16 %v495
    %v692 = vunpack.c.l.b16 %v496
    %v693 = vunpack.c.l.b16 %v497
    %v694 = vunpack.c.l.b16 %v498
    %v695 = vunpack.c.l.b16 %v499
    %v696 = vunpack.c.l.b16 %v500
    %v697 = vunpack.c.l.b16 %v501
    %v698 = vunpack.c.l.b16 %v502
    %v699 = vunpack.c.l.b16 %v503
    %v700 = vunpack.c.l.b16 %v504
    %v701 = vunpack.c.l.b16 %v505
    %v702 = vunpack.c.l.b16 %v506
    %v703 = vunpack.c.l.b16 %v507
    %v704 = vunpack.c.l.b16 %v508
    %v705 = vunpack.c.l.b16 %v509
    %v706 = vunpack.c.l.b16 %v510
    %v707 = vunpack.c.l.b16 %v511
    %v708 = vunpack.c.l.b16 %v512
    %v709 = vunpack.c.l.b16 %v513
    %v710 = vpack.c.b16 %v615, %v614
    %v711 = vpack.c.b16 %v617, %v616
    %v712 = vpack.c.b16 %v619, %v618
    %v713 = vpack.c.b16 %v621, %v620
    %v714 = vpack.c.b16 %v623, %v622
    %v715 = vpack.c.b16 %v625, %v624
    %v716 = vpack.c.b16 %v627, %v626
    %v717 = vpack.c.b16 %v629, %v628
    %v718 = vpack.c.b16 %v631, %v630
    %v719 = vpack.c.b16 %v633, %v632
    %v720 = vpack.c.b16 %v635, %v634
    %v721 = vpack.c.b16 %v637, %v636
    %v722 = vpack.c.b16 %v639, %v638
    %v723 = vpack.c.b16 %v641, %v640
    %v724 = vpack.c.b16 %v643, %v642
    %v725 = vpack.c.b16 %v645, %v644
    %v726 = vpack.c.b16 %v647, %v646
    %v727 = vpack.c.b16 %v649, %v648
    %v728 = vpack.c.b16 %v651, %v650
    %v729 = vpack.c.b16 %v653, %v652
    %v730 = vpack.c.b16 %v655, %v654
    %v731 = vpack.c.b16 %v657, %v656
    %v732 = vpack.c.b16 %v659, %v658
    %v733 = vpack.c.b16 %v661, %v660
    %v734 = vpack.c.b16 %v663, %v662
    %v735 = vpack.c.b16 %v665, %v664
    %v736 = vpack.c.b16 %v667, %v666
    %v737 = vpack.c.b16 %v669, %v668
    %v738 = vpack.c.b16 %v671, %v670
    %v739 = vpack.c.b16 %v673, %v672
    %v740 = vpack.c.b16 %v675, %v674
    %v741 = vpack.c.b16 %v677, %v676
    %v742 = vpack.c.b16 %v679, %v678
    %v743 = vpack.c.b16 %v681, %v680
    %v744 = vpack.c.b16 %v683, %v682
    %v745 = vpack.c.b16 %v685, %v684
    %v746 = vpack.c.b16 %v687, %v686
    %v747 = vpack.c.b16 %v689, %v688
    %v748 = vpack.c.b16 %v691, %v690
    %v749 = vpack.c.b16 %v693, %v692
    %v750 = vpack.c.b16 %v695, %v694
    %v751 = vpack.c.b16 %v697, %v696
    %v752 = vpack.c.b16 %v699, %v698
    %v753 = vpack.c.b16 %v701, %v700
    %v754 = vpack.c.b16 %v703, %v702
    %v755 = vpack.c.b16 %v705, %v704
    %v756 = vpack.c.b16 %v707, %v706
    %v757 = vpack.c.b16 %v709, %v708
    %806 = vmatpush.bf16.msra.mxu0 %v717
    %807 = vmatpush.bf16.msra.mxu0 %v716
    %808 = vmatpush.bf16.msra.mxu0 %v715
    %809 = vmatpush.bf16.msra.mxu0 %v714
    %810 = vmatpush.bf16.msra.mxu0 %v713
    %811 = vmatpush.bf16.msra.mxu0 %v712
    %812 = vmatpush.bf16.msra.mxu0 %v711
    %813 = vmatpush.bf16.msra.mxu0 %v710
    %814 = vmatmul.bf16.gmra.mxu0 %v412
    %v815 = vpop.f32.mrf.mxu0
    %v816 = vadd.f32 %v516, %v815
    %v817 = vpop.f32.mrf.mxu0
    %v818 = vadd.f32 %v516, %v817
    %819 = vdwg.mxu0
    %820 = vmatpush.bf16.msra.mxu0 %v725
    %821 = vmatpush.bf16.msra.mxu0 %v724
    %822 = vmatpush.bf16.msra.mxu0 %v723
    %823 = vmatpush.bf16.msra.mxu0 %v722
    %824 = vmatpush.bf16.msra.mxu0 %v721
    %825 = vmatpush.bf16.msra.mxu0 %v720
    %826 = vmatpush.bf16.msra.mxu0 %v719
    %827 = vmatpush.bf16.msra.mxu0 %v718
    %828 = vmatmul.bf16.gmra.mxu0 %v413
    %v829 = vpop.f32.mrf.mxu0
    %v830 = vadd.f32 %v816, %v829
    %v831 = vpop.f32.mrf.mxu0
    %v832 = vadd.f32 %v818, %v831
    %833 = vdwg.mxu0
    %834 = vmatpush.bf16.msra.mxu0 %v733
    %835 = vmatpush.bf16.msra.mxu0 %v732
    %836 = vmatpush.bf16.msra.mxu0 %v731
    %837 = vmatpush.bf16.msra.mxu0 %v730
    %838 = vmatpush.bf16.msra.mxu0 %v729
    %839 = vmatpush.bf16.msra.mxu0 %v728
    %840 = vmatpush.bf16.msra.mxu0 %v727
    %841 = vmatpush.bf16.msra.mxu0 %v726
    %842 = vmatmul.bf16.gmra.mxu0 %v414
    %v843 = vpop.f32.mrf.mxu0
    %v844 = vadd.f32 %v830, %v843
    %v845 = vpop.f32.mrf.mxu0
    %v846 = vadd.f32 %v832, %v845
    %847 = vdwg.mxu0
    %848 = vmatpush.bf16.msra.mxu0 %v741
    %849 = vmatpush.bf16.msra.mxu0 %v740
    %850 = vmatpush.bf16.msra.mxu0 %v739
    %851 = vmatpush.bf16.msra.mxu0 %v738
    %852 = vmatpush.bf16.msra.mxu0 %v737
    %853 = vmatpush.bf16.msra.mxu0 %v736
    %854 = vmatpush.bf16.msra.mxu0 %v735
    %855 = vmatpush.bf16.msra.mxu0 %v734
    %856 = vmatmul.bf16.gmra.mxu0 %v415
    %v857 = vpop.f32.mrf.mxu0
    %v858 = vadd.f32 %v844, %v857
    %v859 = vpop.f32.mrf.mxu0
    %v860 = vadd.f32 %v846, %v859
    %861 = vdwg.mxu0
    %862 = vmatpush.bf16.msra.mxu0 %v749
    %863 = vmatpush.bf16.msra.mxu0 %v748
    %864 = vmatpush.bf16.msra.mxu0 %v747
    %865 = vmatpush.bf16.msra.mxu0 %v746
    %866 = vmatpush.bf16.msra.mxu0 %v745
    %867 = vmatpush.bf16.msra.mxu0 %v744
    %868 = vmatpush.bf16.msra.mxu0 %v743
    %869 = vmatpush.bf16.msra.mxu0 %v742
    %870 = vmatmul.bf16.gmra.mxu0 %v416
    %v871 = vpop.f32.mrf.mxu0
    %v872 = vadd.f32 %v858, %v871
    %v873 = vpop.f32.mrf.mxu0
    %v874 = vadd.f32 %v860, %v873
    %875 = vdwg.mxu0
    %876 = vmatpush.bf16.msra.mxu0 %v757
    %877 = vmatpush.bf16.msra.mxu0 %v756
    %878 = vmatpush.bf16.msra.mxu0 %v755
    %879 = vmatpush.bf16.msra.mxu0 %v754
    %880 = vmatpush.bf16.msra.mxu0 %v753
    %881 = vmatpush.bf16.msra.mxu0 %v752
    %882 = vmatpush.bf16.msra.mxu0 %v751
    %883 = vmatpush.bf16.msra.mxu0 %v750
    %884 = vmatmul.bf16.gmra.mxu0 %v417
    %v885 = vpop.f32.mrf.mxu0
    %v886 = vadd.f32 %v872, %v885
    %v887 = vpop.f32.mrf.mxu0
    %v888 = vadd.f32 %v874, %v887
    %889 = vdwg.mxu0
    %890 = vst [vmem:[#allocation12] sm:$0xff] %v886
    %891 = vst [vmem:[#allocation12 + $0x8] sm:$0xff] %v888
    %892 = vmax.xlane.f32.xlu0 %v886
    %v893 = vpop.xlane.xlu0 %892
    %894 = vmax.xlane.f32.xlu0 %v888
    %v895 = vpop.xlane.xlu0 %894
    %v896 = vlaneseq
    %v897 = vand.u32 %v896, 127
    %vm898 = vcmp.eq.f32.partialorder %v886, %v893
    %vm899 = vcmp.eq.f32.partialorder %v888, %v895
    %v900 = vsel %vm898, %v897, 128
    %v901 = vsel %vm899, %v897, 128
    %v902 = vand.u32 %v900, 65535
    %v903 = vshra.s32 %v900, 16
    %v904 = vcvt.s32.f32 %v902
    %v905 = vcvt.s32.f32 %v903
    %906 = vmin.xlane.f32.xlu0 %v905
    %v907 = vpop.xlane.xlu0 %906
    %vm908 = vcmp.eq.f32.partialorder %v905, %v907
    %v909 = vsel %vm908, %v904, inf
    %910 = vmin.xlane.f32.xlu0 %v909
    %v911 = vpop.xlane.xlu0 %910
    %v912 = vcvt.f32.s32 %v911
    %v913 = vcvt.f32.s32 %v907
    %v914 = vshll.u32 %v913, 16
    %v915 = vadd.s32 %v914, %v912
    %v916 = vand.u32 %v901, 65535
    %v917 = vshra.s32 %v901, 16
    %v918 = vcvt.s32.f32 %v916
    %v919 = vcvt.s32.f32 %v917
    %920 = vmin.xlane.f32.xlu0 %v919
    %v921 = vpop.xlane.xlu0 %920
    %vm922 = vcmp.eq.f32.partialorder %v919, %v921
    %v923 = vsel %vm922, %v918, inf
    %924 = vmin.xlane.f32.xlu0 %v923
    %v925 = vpop.xlane.xlu0 %924
    %v926 = vcvt.f32.s32 %v925
    %v927 = vcvt.f32.s32 %v921
    %v928 = vshll.u32 %v927, 16
    %v929 = vadd.s32 %v928, %v926
    %930 = vst [vmem:[#allocation14] sm:$0xff] %v915
    %931 = vst [vmem:[#allocation14 + $0x8] sm:$0xff] %v929
    // Predicated region
    $region22: #{tpu_custom_call.1} parent=1 // pred_check
      _
    $region23: #{tpu_custom_call.1} parent=1 // pred_check_branch
      %933 = sbr.rel (0) target = $region25
    $region24: #{tpu_custom_call.1} parent=1 // pred_region
      %935 = vsyncadd [#allocation8], 0
      %s936 = sshll.u32 [#allocation11], 4
      %s937 = int_to_ptr.vmem [resolvable:$true] %s936
      %s938 = sshll.u32 %s5, 4
      %s939 = int_to_ptr.hbm [resolvable:$true] %s938
      %944 = dma.vmem_to_hbm [thread:$0]  %s937, 1536, %s939, [#allocation8], 768, 768, 48
    $region25: #{tpu_custom_call.1} parent=1 // pred_fallthru
      _
    // Predicated region
    $region26: #{tpu_custom_call.1} parent=1 // pred_check
      _
    $region27: #{tpu_custom_call.1} parent=1 // pred_check_branch
      %946 = sbr.rel (0) target = $region29
    $region28: #{tpu_custom_call.1} parent=1 // pred_region
      %948 = vsyncadd [#allocation13], 0
      %s949 = sshll.u32 [#allocation12], 4
      %s950 = int_to_ptr.vmem [resolvable:$true] %s949
      %s951 = sshll.u32 %s6, 4
      %s952 = int_to_ptr.hbm [resolvable:$true] %s951
      %957 = dma.vmem_to_hbm [thread:$0]  %s950, 256, %s952, [#allocation13], 128, 128, 8
    $region29: #{tpu_custom_call.1} parent=1 // pred_fallthru
      _
    // Predicated region
    $region30: #{tpu_custom_call.1} parent=1 // pred_check
      _
    $region31: #{tpu_custom_call.1} parent=1 // pred_check_branch
      %959 = sbr.rel (0) target = $region33
    $region32: #{tpu_custom_call.1} parent=1 // pred_region
      %961 = vsyncadd [#allocation13], 0
      %s962 = sshll.u32 [#allocation14], 4
      %s963 = int_to_ptr.vmem [resolvable:$true] %s962
      %s964 = sshll.u32 %s7, 4
      %s965 = int_to_ptr.hbm [resolvable:$true] %s964
      %970 = dma.vmem_to_hbm [thread:$0]  %s963, 256, %s965, [#allocation13], 128, 128, 8
    $region33: #{tpu_custom_call.1} parent=1 // pred_fallthru
      _
    // Predicated region
    $region34: #{tpu_custom_call.1} parent=1 // pred_check
      _
    $region35: #{tpu_custom_call.1} parent=1 // pred_check_branch
      %972 = sbr.rel (0) target = $region37
    $region36: #{tpu_custom_call.1} parent=1 // pred_region
      %974 = dma.done [#allocation8], 1536
    $region37: #{tpu_custom_call.1} parent=1 // pred_fallthru
      _
    // Predicated region
    $region38: #{tpu_custom_call.1} parent=1 // pred_check
      _
    $region39: #{tpu_custom_call.1} parent=1 // pred_check_branch
      %976 = sbr.rel (0) target = $region41
    $region40: #{tpu_custom_call.1} parent=1 // pred_region
      %978 = dma.done [#allocation13], 256
    $region41: #{tpu_custom_call.1} parent=1 // pred_fallthru
      _
    // Predicated region
    $region42: #{tpu_custom_call.1} parent=1 // pred_check
      _
    $region43: #{tpu_custom_call.1} parent=1 // pred_check_branch
      %980 = sbr.rel (0) target = $region45
    $region44: #{tpu_custom_call.1} parent=1 // pred_region
      %982 = dma.done [#allocation13], 256
    $region45: #{tpu_custom_call.1} parent=1 // pred_fallthru
      _
    %983 = vsyncpa [#allocation7], 1
    %984 = vsyncpa [#allocation10], 1
    %985 = vsyncpa [#allocation8], 1
    %986 = vsyncpa [#allocation13], 1
  %987 = vsyncmov [#allocation3]
  %s988 = vpop.sfrf %987
  %p989 = scmp.eq.s32.totalorder %s988, 0
  %p990 = pneg %p989
  %992 = shalt.err (%p990)
  %s993 = scalar_lea.sflag [#allocation3], 1
  %994 = vsyncmov %s993
  %s995 = vpop.sfrf %994
  %p996 = scmp.eq.s32.totalorder %s995, 0
  %p997 = pneg %p996
  %999 = shalt.err (%p997)
  %s1000 = scalar_lea.sflag [#allocation3], 2
  %1001 = vsyncmov %s1000
  %s1002 = vpop.sfrf %1001
  %p1003 = scmp.eq.s32.totalorder %s1002, 0
  %p1004 = pneg %p1003
  %1006 = shalt.err (%p1004)
  %s1007 = scalar_lea.sflag [#allocation3], 3
  %1008 = vsyncmov %s1007
  %s1009 = vpop.sfrf %1008
  %p1010 = scmp.eq.s32.totalorder %s1009, 0
  %p1011 = pneg %p1010
  %1013 = shalt.err (%p1011)
  %s1014 = scalar_lea.sflag [#allocation3], 4
  %1015 = vsyncmov %s1014
  %s1016 = vpop.sfrf %1015
  %p1017 = scmp.eq.s32.totalorder %s1016, 0
  %p1018 = pneg %p1017
  %1020 = shalt.err (%p1018)
  %s1021 = scalar_lea.sflag [#allocation3], 5
  %1022 = vsyncmov %s1021
  %s1023 = vpop.sfrf %1022
  %p1024 = scmp.eq.s32.totalorder %s1023, 0
  %p1025 = pneg %p1024
  %1027 = shalt.err (%p1025)
  %s1028 = scalar_lea.sflag [#allocation3], 6
  %1029 = vsyncmov %s1028
  %s1030 = vpop.sfrf %1029
  %p1031 = scmp.eq.s32.totalorder %s1030, 0
  %p1032 = pneg %p1031
  %1034 = shalt.err (%p1032)
  %s1035 = scalar_lea.sflag [#allocation3], 7
  %1036 = vsyncmov %s1035
  %s1037 = vpop.sfrf %1036
  %p1038 = scmp.eq.s32.totalorder %s1037, 0
  %p1039 = pneg %p1038
  %1041 = shalt.err (%p1039)
  %s1042 = scalar_lea.sflag [#allocation3], 8
  %1043 = vsyncmov %s1042
  %s1044 = vpop.sfrf %1043
  %p1045 = scmp.eq.s32.totalorder %s1044, 0
  %p1046 = pneg %p1045
  %1048 = shalt.err (%p1046)
  %s1049 = scalar_lea.sflag [#allocation3], 9
  %1050 = vsyncmov %s1049
  %s1051 = vpop.sfrf %1050
  %p1052 = scmp.eq.s32.totalorder %s1051, 0
  %p1053 = pneg %p1052
  %1055 = shalt.err (%p1053)
  %s1056 = scalar_lea.sflag [#allocation3], 10
  %1057 = vsyncmov %s1056
  %s1058 = vpop.sfrf %1057
  %p1059 = scmp.eq.s32.totalorder %s1058, 0
  %p1060 = pneg %p1059
  %1062 = shalt.err (%p1060)
  %s1063 = scalar_lea.sflag [#allocation3], 11
  %1064 = vsyncmov %s1063
  %s1065 = vpop.sfrf %1064
  %p1066 = scmp.eq.s32.totalorder %s1065, 0
  %p1067 = pneg %p1066
  %1069 = shalt.err (%p1067)
  %s1070 = scalar_lea.sflag [#allocation3], 12
  %1071 = vsyncmov %s1070
  %s1072 = vpop.sfrf %1071
  %p1073 = scmp.eq.s32.totalorder %s1072, 0
  %p1074 = pneg %p1073
  %1076 = shalt.err (%p1074)
  %s1077 = scalar_lea.sflag [#allocation3], 13
  %1078 = vsyncmov %s1077
  %s1079 = vpop.sfrf %1078
  %p1080 = scmp.eq.s32.totalorder %s1079, 0
  %p1081 = pneg %p1080
  %1083 = shalt.err (%p1081)
  %s1084 = scalar_lea.sflag [#allocation3], 14
  %1085 = vsyncmov %s1084
  %s1086 = vpop.sfrf %1085
  %p1087 = scmp.eq.s32.totalorder %s1086, 0
  %p1088 = pneg %p1087
  %1090 = shalt.err (%p1088)
  %s1091 = scalar_lea.sflag [#allocation3], 15
  %1092 = vsyncmov %s1091
  %s1093 = vpop.sfrf %1092
  %p1094 = scmp.eq.s32.totalorder %s1093, 0
  %p1095 = pneg %p1094
  %1097 = shalt.err (%p1095)

</llo_original>
